<compile_context>
chip_gen: v6e
topology: v6e:2x2x1
jax: 0.10.0
libtpu: 0.0.40
codegen_flags: <defaults>
</compile_context>

<pallas_src>
import jax
import jax.numpy as jnp
from jax import lax
from jax.experimental import pallas as pl
from jax.experimental.pallas import tpu as pltpu


# ---------------------------------------------------------------------------
# Kernels
# ---------------------------------------------------------------------------
def _mm(a, b):
    return jnp.dot(a, b, preferred_element_type=jnp.float32)


def _fused_mlp_kernel(x_ref, noise_ref,
                      gw1_ref, gb1_ref, gw2_ref, gb2_ref,
                      dw1_ref, db1_ref, dw2_ref, db2_ref,
                      xgen_ref, emb_ref, z_ref):
    """One row tile: x_ = gen(noise); emb = disc(x); z_ = disc(x_)."""
    # generator: noise -> hid -> in_dim
    h = _mm(noise_ref[...], gw1_ref[...]) + gb1_ref[...]
    h = jnp.maximum(h, 0.0)
    x_f32 = _mm(h.astype(jnp.bfloat16), gw2_ref[...]) + gb2_ref[...]
    xgen_ref[...] = x_f32.astype(xgen_ref.dtype)

    # discriminator on real x: in_dim -> hid -> hid
    h1 = _mm(x_ref[...], dw1_ref[...]) + db1_ref[...]
    h1 = jnp.maximum(h1, 0.0)
    emb = _mm(h1.astype(jnp.bfloat16), dw2_ref[...]) + db2_ref[...]
    emb_ref[...] = emb.astype(emb_ref.dtype)

    # discriminator on fake x_ (still in VMEM / vregs; no HBM round trip)
    h2 = _mm(x_f32.astype(jnp.bfloat16), dw1_ref[...]) + db1_ref[...]
    h2 = jnp.maximum(h2, 0.0)
    z = _mm(h2.astype(jnp.bfloat16), dw2_ref[...]) + db2_ref[...]
    z_ref[...] = z.astype(z_ref.dtype)


def _dual_gram_sigmoid_kernel(ei_ref, ej_ref, zi_ref, zj_ref, a_ref, a2_ref):
    """a[i,j] = sigmoid(emb_i @ emb_j^T); a_[i,j] = sigmoid(z_i @ z_j^T)."""
    dn = (((1,), (1,)), ((), ()))   # contract last dims (trans-B, no XLU transpose)
    ga = lax.dot_general(ei_ref[...], ej_ref[...], dimension_numbers=dn,
                         preferred_element_type=jnp.float32)
    a_ref[...] = jax.nn.sigmoid(ga).astype(a_ref.dtype)
    gz = lax.dot_general(zi_ref[...], zj_ref[...], dimension_numbers=dn,
                         preferred_element_type=jnp.float32)
    a2_ref[...] = jax.nn.sigmoid(gz).astype(a2_ref.dtype)


# ---------------------------------------------------------------------------
# Wrappers (grids / BlockSpecs)
# ---------------------------------------------------------------------------
def _row_tile(n, pref=128):
    return n if n <= pref else pref


def fused_mlps(x, noise, gen_params, dis_params, *, tm=128):
    """Row-tiled fused generator + both discriminator passes.

    Returns (x_ [N, in_dim] f32, emb [N, hid] bf16, z_ [N, hid] bf16)."""
    gw1, gb1, gw2, gb2 = gen_params
    dw1, db1, dw2, db2 = dis_params
    n, in_dim = x.shape
    noise_dim = noise.shape[1]
    hid = gw1.shape[1]
    out_hid = dw2.shape[1]
    tm = _row_tile(n, tm)
    full = lambda i: (0, 0)
    row = lambda i: (i, 0)
    return pl.pallas_call(
        _fused_mlp_kernel,
        out_shape=(jax.ShapeDtypeStruct((n, in_dim), jnp.float32),
                   jax.ShapeDtypeStruct((n, out_hid), jnp.bfloat16),
                   jax.ShapeDtypeStruct((n, out_hid), jnp.bfloat16)),
        grid=(pl.cdiv(n, tm),),
        in_specs=[
            pl.BlockSpec((tm, in_dim), row),
            pl.BlockSpec((tm, noise_dim), row),
            pl.BlockSpec((noise_dim, hid), full),
            pl.BlockSpec((1, hid), full),
            pl.BlockSpec((hid, in_dim), full),
            pl.BlockSpec((1, in_dim), full),
            pl.BlockSpec((in_dim, hid), full),
            pl.BlockSpec((1, hid), full),
            pl.BlockSpec((hid, out_hid), full),
            pl.BlockSpec((1, out_hid), full),
        ],
        out_specs=(pl.BlockSpec((tm, in_dim), row),
                   pl.BlockSpec((tm, out_hid), row),
                   pl.BlockSpec((tm, out_hid), row)),
        compiler_params=pltpu.CompilerParams(dimension_semantics=("parallel",)),
    )(x, noise, gw1, gb1, gw2, gb2, dw1, db1, dw2, db2)


def dual_gram_sigmoid(emb, z, *, tm=128, tn=128):
    """(sigmoid(emb @ emb.T), sigmoid(z @ z.T)) tiled over (tm, tn) output blocks."""
    n, hid = emb.shape
    tm = _row_tile(n, tm)
    tn = _row_tile(n, tn)
    return pl.pallas_call(
        _dual_gram_sigmoid_kernel,
        out_shape=(jax.ShapeDtypeStruct((n, n), jnp.float32),
                   jax.ShapeDtypeStruct((n, n), jnp.float32)),
        grid=(pl.cdiv(n, tm), pl.cdiv(n, tn)),
        in_specs=[
            pl.BlockSpec((tm, hid), lambda i, j: (i, 0)),
            pl.BlockSpec((tn, hid), lambda i, j: (j, 0)),
            pl.BlockSpec((tm, hid), lambda i, j: (i, 0)),
            pl.BlockSpec((tn, hid), lambda i, j: (j, 0)),
        ],
        out_specs=(pl.BlockSpec((tm, tn), lambda i, j: (i, j)),
                   pl.BlockSpec((tm, tn), lambda i, j: (i, j))),
        compiler_params=pltpu.CompilerParams(
            dimension_semantics=("parallel", "parallel")),
    )(emb, emb, z, z)


# ---------------------------------------------------------------------------
# Params + forward
# ---------------------------------------------------------------------------
def init_params(key, in_dim, noise_dim, hid_dim):
    """Glorot-ish init; weights stored bf16, biases f32."""
    ks = jax.random.split(key, 4)

    def lin(k, fan_in, fan_out):
        scale = jnp.sqrt(2.0 / (fan_in + fan_out))
        w = (jax.random.normal(k, (fan_in, fan_out), jnp.float32) * scale)
        return w.astype(jnp.bfloat16), jnp.zeros((1, fan_out), jnp.float32)

    # generator: noise_dim -> hid -> in_dim   (floor(4/2) = 2 layers)
    g_w1, g_b1 = lin(ks[0], noise_dim, hid_dim)
    g_w2, g_b2 = lin(ks[1], hid_dim, in_dim)
    # discriminator: in_dim -> hid -> hid     (ceil(4/2) = 2 layers)
    d_w1, d_b1 = lin(ks[2], in_dim, hid_dim)
    d_w2, d_b2 = lin(ks[3], hid_dim, hid_dim)
    return dict(gen=(g_w1, g_b1, g_w2, g_b2), dis=(d_w1, d_b1, d_w2, d_b2))


@jax.jit
def gaan_forward(params, x, noise):
    gen = params["gen"]
    dis = params["dis"]
    x_, emb, z_ = fused_mlps(x.astype(jnp.bfloat16), noise.astype(jnp.bfloat16),
                             gen, dis)                  # one fused kernel
    a, a_ = dual_gram_sigmoid(emb, z_)                  # one fused kernel
    return x_, a, a_


# Pure-JAX reference with the same bf16-input / f32-accumulate numerics.
def _ref_mlp2(x, w1, b1, w2, b2):
    h = jnp.dot(x.astype(jnp.bfloat16), w1, preferred_element_type=jnp.float32) + b1
    h = jnp.maximum(h, 0.0)
    return jnp.dot(h.astype(jnp.bfloat16), w2, preferred_element_type=jnp.float32) + b2


def ref_forward(params, x, noise):
    gw1, gb1, gw2, gb2 = params["gen"]
    dw1, db1, dw2, db2 = params["dis"]
    x_ = _ref_mlp2(noise, gw1, gb1, gw2, gb2)
    emb = _ref_mlp2(x, dw1, db1, dw2, db2).astype(jnp.bfloat16)
    z_ = _ref_mlp2(x_, dw1, db1, dw2, db2).astype(jnp.bfloat16)
    a = jax.nn.sigmoid(jnp.dot(emb, emb.T, preferred_element_type=jnp.float32))
    a_ = jax.nn.sigmoid(jnp.dot(z_, z_.T, preferred_element_type=jnp.float32))
    return x_, a, a_


if __name__ == "__main__":
    N = 256          # number of nodes (exercises the grids: 2 row tiles, 2x2 gram)
    in_dim = 32      # node feature dim
    noise_dim = 16   # module default
    hid_dim = 64     # module default

    key = jax.random.PRNGKey(0)
    k_param, k_x, k_n = jax.random.split(key, 3)

    params = init_params(k_param, in_dim, noise_dim, hid_dim)
    x = jax.random.normal(k_x, (N, in_dim), jnp.float32)
    noise = jax.random.normal(k_n, (N, noise_dim), jnp.float32)

    x_, a, a_ = gaan_forward(params, x, noise)
    jax.block_until_ready((x_, a, a_))

    # shape / range sanity
    assert x_.shape == (N, in_dim)
    assert a.shape == (N, N) and a_.shape == (N, N)
    assert bool(jnp.all((a >= 0) & (a <= 1)))
    assert bool(jnp.all((a_ >= 0) & (a_ <= 1)))

    # numerical check against a pure-JAX reference (same bf16/f32 numerics)
    rx_, ra, ra_ = ref_forward(params, x, noise)
    assert bool(jnp.max(jnp.abs(x_ - rx_)) < 2e-2)
    assert bool(jnp.max(jnp.abs(a - ra)) < 2e-2)
    assert bool(jnp.max(jnp.abs(a_ - ra_)) < 2e-2)

    print("KERNEL_OK")
</pallas_src>

<mosaic_0001>
module attributes {stable_mosaic.version = 11 : i64} {
  func.func @_dual_gram_sigmoid_kernel(%arg0: i32, %arg1: i32, %arg2: memref<128x64xbf16, #tpu.memory_space<vmem>>, %arg3: memref<128x64xbf16, #tpu.memory_space<vmem>>, %arg4: memref<128x64xbf16, #tpu.memory_space<vmem>>, %arg5: memref<128x64xbf16, #tpu.memory_space<vmem>>, %arg6: memref<128x128xf32, #tpu.memory_space<vmem>>, %arg7: memref<128x128xf32, #tpu.memory_space<vmem>>) attributes {dimension_semantics = [#tpu.dimension_semantics<parallel>, #tpu.dimension_semantics<parallel>], iteration_bounds = array<i64: 2, 2>, scalar_prefetch = 0 : i64, scratch_operands = 0 : i64, tpu.core_type = #tpu.core_type<tc>, window_params = [{transform_indices = @transform_0, window_bounds = array<i64: 128, 64>}, {transform_indices = @transform_1, window_bounds = array<i64: 128, 64>}, {transform_indices = @transform_2, window_bounds = array<i64: 128, 64>}, {transform_indices = @transform_3, window_bounds = array<i64: 128, 64>}, {transform_indices = @transform_4, window_bounds = array<i64: 128, 128>}, {transform_indices = @transform_5, window_bounds = array<i64: 128, 128>}]} {
    %c0 = arith.constant 0 : index
    %c0_0 = arith.constant 0 : index
    %0 = vector.load %arg2[%c0, %c0_0] : memref<128x64xbf16, #tpu.memory_space<vmem>>, vector<128x64xbf16>
    %c0_1 = arith.constant 0 : index
    %c0_2 = arith.constant 0 : index
    %1 = vector.load %arg3[%c0_1, %c0_2] : memref<128x64xbf16, #tpu.memory_space<vmem>>, vector<128x64xbf16>
    %cst = arith.constant dense<0.000000e+00> : vector<128x128xf32>
    %2 = tpu.matmul %0, %1, %cst {dimension_numbers = #tpu.dot_dimension_numbers<[1], [1], [0], [0], [0, 0, 1, 0], [], []>} : vector<128x64xbf16>, vector<128x64xbf16>, vector<128x128xf32> -> vector<128x128xf32>
    %3 = arith.negf %2 : vector<128x128xf32>
    %4 = math.exp %3 : vector<128x128xf32>
    %cst_3 = arith.constant 1.000000e+00 : f32
    %5 = vector.broadcast %cst_3 : f32 to vector<128x128xf32>
    %6 = arith.addf %5, %4 : vector<128x128xf32>
    %7 = arith.divf %5, %6 : vector<128x128xf32>
    %c0_4 = arith.constant 0 : index
    %c0_5 = arith.constant 0 : index
    %8 = vector.load %arg6[%c0_4, %c0_5] : memref<128x128xf32, #tpu.memory_space<vmem>>, vector<128x128xf32>
    tpu.vector_store %arg6[%c0_4, %c0_5], %7 {strides = array<i32>} : memref<128x128xf32, #tpu.memory_space<vmem>>, vector<128x128xf32>,
    %c0_6 = arith.constant 0 : index
    %c0_7 = arith.constant 0 : index
    %9 = vector.load %arg4[%c0_6, %c0_7] : memref<128x64xbf16, #tpu.memory_space<vmem>>, vector<128x64xbf16>
    %c0_8 = arith.constant 0 : index
    %c0_9 = arith.constant 0 : index
    %10 = vector.load %arg5[%c0_8, %c0_9] : memref<128x64xbf16, #tpu.memory_space<vmem>>, vector<128x64xbf16>
    %cst_10 = arith.constant dense<0.000000e+00> : vector<128x128xf32>
    %11 = tpu.matmul %9, %10, %cst_10 {dimension_numbers = #tpu.dot_dimension_numbers<[1], [1], [0], [0], [0, 0, 1, 0], [], []>} : vector<128x64xbf16>, vector<128x64xbf16>, vector<128x128xf32> -> vector<128x128xf32>
    %12 = arith.negf %11 : vector<128x128xf32>
    %13 = math.exp %12 : vector<128x128xf32>
    %cst_11 = arith.constant 1.000000e+00 : f32
    %14 = vector.broadcast %cst_11 : f32 to vector<128x128xf32>
    %15 = arith.addf %14, %13 : vector<128x128xf32>
    %16 = arith.divf %14, %15 : vector<128x128xf32>
    %c0_12 = arith.constant 0 : index
    %c0_13 = arith.constant 0 : index
    %17 = vector.load %arg7[%c0_12, %c0_13] : memref<128x128xf32, #tpu.memory_space<vmem>>, vector<128x128xf32>
    tpu.vector_store %arg7[%c0_12, %c0_13], %16 {strides = array<i32>} : memref<128x128xf32, #tpu.memory_space<vmem>>, vector<128x128xf32>,
    return
  }
  func.func @transform_0(%arg0: i32, %arg1: i32) -> (i32, i32) {
    %c0_i32 = arith.constant 0 : i32
    %c0_i32_0 = arith.constant 0 : i32
    return %arg0, %c0_i32 : i32, i32
  }
  func.func @transform_1(%arg0: i32, %arg1: i32) -> (i32, i32) {
    %c0_i32 = arith.constant 0 : i32
    %c0_i32_0 = arith.constant 0 : i32
    return %arg1, %c0_i32 : i32, i32
  }
  func.func @transform_2(%arg0: i32, %arg1: i32) -> (i32, i32) {
    %c0_i32 = arith.constant 0 : i32
    %c0_i32_0 = arith.constant 0 : i32
    return %arg0, %c0_i32 : i32, i32
  }
  func.func @transform_3(%arg0: i32, %arg1: i32) -> (i32, i32) {
    %c0_i32 = arith.constant 0 : i32
    %c0_i32_0 = arith.constant 0 : i32
    return %arg1, %c0_i32 : i32, i32
  }
  func.func @transform_4(%arg0: i32, %arg1: i32) -> (i32, i32) {
    %c0_i32 = arith.constant 0 : i32
    return %arg0, %arg1 : i32, i32
  }
  func.func @transform_5(%arg0: i32, %arg1: i32) -> (i32, i32) {
    %c0_i32 = arith.constant 0 : i32
    return %arg0, %arg1 : i32, i32
  }
}

module attributes {stable_mosaic.version = 11 : i64} {
  func.func @_fused_mlp_kernel(%arg0: i32, %arg1: memref<128x32xbf16, #tpu.memory_space<vmem>>, %arg2: memref<128x16xbf16, #tpu.memory_space<vmem>>, %arg3: memref<16x64xbf16, #tpu.memory_space<vmem>>, %arg4: memref<1x64xf32, #tpu.memory_space<vmem>>, %arg5: memref<64x32xbf16, #tpu.memory_space<vmem>>, %arg6: memref<1x32xf32, #tpu.memory_space<vmem>>, %arg7: memref<32x64xbf16, #tpu.memory_space<vmem>>, %arg8: memref<1x64xf32, #tpu.memory_space<vmem>>, %arg9: memref<64x64xbf16, #tpu.memory_space<vmem>>, %arg10: memref<1x64xf32, #tpu.memory_space<vmem>>, %arg11: memref<128x32xf32, #tpu.memory_space<vmem>>, %arg12: memref<128x64xbf16, #tpu.memory_space<vmem>>, %arg13: memref<128x64xbf16, #tpu.memory_space<vmem>>) attributes {dimension_semantics = [#tpu.dimension_semantics<parallel>], iteration_bounds = array<i64: 2>, scalar_prefetch = 0 : i64, scratch_operands = 0 : i64, tpu.core_type = #tpu.core_type<tc>, window_params = [{transform_indices = @transform_0, window_bounds = array<i64: 128, 32>}, {transform_indices = @transform_1, window_bounds = array<i64: 128, 16>}, {pipeline_mode = #tpu.pipeline_mode<synchronous>, transform_indices = @transform_2, window_bounds = array<i64: 16, 64>}, {pipeline_mode = #tpu.pipeline_mode<synchronous>, transform_indices = @transform_3, window_bounds = array<i64: 1, 64>}, {pipeline_mode = #tpu.pipeline_mode<synchronous>, transform_indices = @transform_4, window_bounds = array<i64: 64, 32>}, {pipeline_mode = #tpu.pipeline_mode<synchronous>, transform_indices = @transform_5, window_bounds = array<i64: 1, 32>}, {pipeline_mode = #tpu.pipeline_mode<synchronous>, transform_indices = @transform_6, window_bounds = array<i64: 32, 64>}, {pipeline_mode = #tpu.pipeline_mode<synchronous>, transform_indices = @transform_7, window_bounds = array<i64: 1, 64>}, {pipeline_mode = #tpu.pipeline_mode<synchronous>, transform_indices = @transform_8, window_bounds = array<i64: 64, 64>}, {pipeline_mode = #tpu.pipeline_mode<synchronous>, transform_indices = @transform_9, window_bounds = array<i64: 1, 64>}, {transform_indices = @transform_10, window_bounds = array<i64: 128, 32>}, {transform_indices = @transform_11, window_bounds = array<i64: 128, 64>}, {transform_indices = @transform_12, window_bounds = array<i64: 128, 64>}]} {
    %c0 = arith.constant 0 : index
    %c0_0 = arith.constant 0 : index
    %0 = vector.load %arg2[%c0, %c0_0] : memref<128x16xbf16, #tpu.memory_space<vmem>>, vector<128x16xbf16>
    %c0_1 = arith.constant 0 : index
    %c0_2 = arith.constant 0 : index
    %1 = vector.load %arg3[%c0_1, %c0_2] : memref<16x64xbf16, #tpu.memory_space<vmem>>, vector<16x64xbf16>
    %cst = arith.constant dense<0.000000e+00> : vector<128x64xf32>
    %2 = tpu.matmul %0, %1, %cst {dimension_numbers = #tpu.dot_dimension_numbers<[1], [0], [0], [1], [0, 0, 1, 1], [], []>} : vector<128x16xbf16>, vector<16x64xbf16>, vector<128x64xf32> -> vector<128x64xf32>
    %c0_3 = arith.constant 0 : index
    %c0_4 = arith.constant 0 : index
    %3 = vector.load %arg4[%c0_3, %c0_4] : memref<1x64xf32, #tpu.memory_space<vmem>>, vector<1x64xf32>
    %4 = vector.broadcast %3 : vector<1x64xf32> to vector<128x64xf32>
    %5 = arith.addf %2, %4 : vector<128x64xf32>
    %cst_5 = arith.constant 0.000000e+00 : f32
    %6 = vector.broadcast %cst_5 : f32 to vector<128x64xf32>
    %7 = arith.maximumf %5, %6 : vector<128x64xf32>
    %8 = arith.truncf %7 : vector<128x64xf32> to vector<128x64xbf16>
    %c0_6 = arith.constant 0 : index
    %c0_7 = arith.constant 0 : index
    %9 = vector.load %arg5[%c0_6, %c0_7] : memref<64x32xbf16, #tpu.memory_space<vmem>>, vector<64x32xbf16>
    %cst_8 = arith.constant dense<0.000000e+00> : vector<128x32xf32>
    %10 = tpu.matmul %8, %9, %cst_8 {dimension_numbers = #tpu.dot_dimension_numbers<[1], [0], [0], [1], [0, 0, 1, 1], [], []>} : vector<128x64xbf16>, vector<64x32xbf16>, vector<128x32xf32> -> vector<128x32xf32>
    %c0_9 = arith.constant 0 : index
    %c0_10 = arith.constant 0 : index
    %11 = vector.load %arg6[%c0_9, %c0_10] : memref<1x32xf32, #tpu.memory_space<vmem>>, vector<1x32xf32>
    %12 = vector.broadcast %11 : vector<1x32xf32> to vector<128x32xf32>
    %13 = arith.addf %10, %12 : vector<128x32xf32>
    %c0_11 = arith.constant 0 : index
    %c0_12 = arith.constant 0 : index
    %14 = vector.load %arg11[%c0_11, %c0_12] : memref<128x32xf32, #tpu.memory_space<vmem>>, vector<128x32xf32>
    tpu.vector_store %arg11[%c0_11, %c0_12], %13 {strides = array<i32>} : memref<128x32xf32, #tpu.memory_space<vmem>>, vector<128x32xf32>,
    %c0_13 = arith.constant 0 : index
    %c0_14 = arith.constant 0 : index
    %15 = vector.load %arg1[%c0_13, %c0_14] : memref<128x32xbf16, #tpu.memory_space<vmem>>, vector<128x32xbf16>
    %c0_15 = arith.constant 0 : index
    %c0_16 = arith.constant 0 : index
    %16 = vector.load %arg7[%c0_15, %c0_16] : memref<32x64xbf16, #tpu.memory_space<vmem>>, vector<32x64xbf16>
    %cst_17 = arith.constant dense<0.000000e+00> : vector<128x64xf32>
    %17 = tpu.matmul %15, %16, %cst_17 {dimension_numbers = #tpu.dot_dimension_numbers<[1], [0], [0], [1], [0, 0, 1, 1], [], []>} : vector<128x32xbf16>, vector<32x64xbf16>, vector<128x64xf32> -> vector<128x64xf32>
    %c0_18 = arith.constant 0 : index
    %c0_19 = arith.constant 0 : index
    %18 = vector.load %arg8[%c0_18, %c0_19] : memref<1x64xf32, #tpu.memory_space<vmem>>, vector<1x64xf32>
    %19 = vector.broadcast %18 : vector<1x64xf32> to vector<128x64xf32>
    %20 = arith.addf %17, %19 : vector<128x64xf32>
    %cst_20 = arith.constant 0.000000e+00 : f32
    %21 = vector.broadcast %cst_20 : f32 to vector<128x64xf32>
    %22 = arith.maximumf %20, %21 : vector<128x64xf32>
    %23 = arith.truncf %22 : vector<128x64xf32> to vector<128x64xbf16>
    %c0_21 = arith.constant 0 : index
    %c0_22 = arith.constant 0 : index
    %24 = vector.load %arg9[%c0_21, %c0_22] : memref<64x64xbf16, #tpu.memory_space<vmem>>, vector<64x64xbf16>
    %cst_23 = arith.constant dense<0.000000e+00> : vector<128x64xf32>
    %25 = tpu.matmul %23, %24, %cst_23 {dimension_numbers = #tpu.dot_dimension_numbers<[1], [0], [0], [1], [0, 0, 1, 1], [], []>} : vector<128x64xbf16>, vector<64x64xbf16>, vector<128x64xf32> -> vector<128x64xf32>
    %c0_24 = arith.constant 0 : index
    %c0_25 = arith.constant 0 : index
    %26 = vector.load %arg10[%c0_24, %c0_25] : memref<1x64xf32, #tpu.memory_space<vmem>>, vector<1x64xf32>
    %27 = vector.broadcast %26 : vector<1x64xf32> to vector<128x64xf32>
    %28 = arith.addf %25, %27 : vector<128x64xf32>
    %29 = arith.truncf %28 : vector<128x64xf32> to vector<128x64xbf16>
    %c0_26 = arith.constant 0 : index
    %c0_27 = arith.constant 0 : index
    %30 = vector.load %arg12[%c0_26, %c0_27] : memref<128x64xbf16, #tpu.memory_space<vmem>>, vector<128x64xbf16>
    tpu.vector_store %arg12[%c0_26, %c0_27], %29 {strides = array<i32>} : memref<128x64xbf16, #tpu.memory_space<vmem>>, vector<128x64xbf16>,
    %31 = arith.truncf %13 : vector<128x32xf32> to vector<128x32xbf16>
    %c0_28 = arith.constant 0 : index
    %c0_29 = arith.constant 0 : index
    %32 = vector.load %arg7[%c0_28, %c0_29] : memref<32x64xbf16, #tpu.memory_space<vmem>>, vector<32x64xbf16>
    %cst_30 = arith.constant dense<0.000000e+00> : vector<128x64xf32>
    %33 = tpu.matmul %31, %32, %cst_30 {dimension_numbers = #tpu.dot_dimension_numbers<[1], [0], [0], [1], [0, 0, 1, 1], [], []>} : vector<128x32xbf16>, vector<32x64xbf16>, vector<128x64xf32> -> vector<128x64xf32>
    %c0_31 = arith.constant 0 : index
    %c0_32 = arith.constant 0 : index
    %34 = vector.load %arg8[%c0_31, %c0_32] : memref<1x64xf32, #tpu.memory_space<vmem>>, vector<1x64xf32>
    %35 = vector.broadcast %34 : vector<1x64xf32> to vector<128x64xf32>
    %36 = arith.addf %33, %35 : vector<128x64xf32>
    %cst_33 = arith.constant 0.000000e+00 : f32
    %37 = vector.broadcast %cst_33 : f32 to vector<128x64xf32>
    %38 = arith.maximumf %36, %37 : vector<128x64xf32>
    %39 = arith.truncf %38 : vector<128x64xf32> to vector<128x64xbf16>
    %c0_34 = arith.constant 0 : index
    %c0_35 = arith.constant 0 : index
    %40 = vector.load %arg9[%c0_34, %c0_35] : memref<64x64xbf16, #tpu.memory_space<vmem>>, vector<64x64xbf16>
    %cst_36 = arith.constant dense<0.000000e+00> : vector<128x64xf32>
    %41 = tpu.matmul %39, %40, %cst_36 {dimension_numbers = #tpu.dot_dimension_numbers<[1], [0], [0], [1], [0, 0, 1, 1], [], []>} : vector<128x64xbf16>, vector<64x64xbf16>, vector<128x64xf32> -> vector<128x64xf32>
    %c0_37 = arith.constant 0 : index
    %c0_38 = arith.constant 0 : index
    %42 = vector.load %arg10[%c0_37, %c0_38] : memref<1x64xf32, #tpu.memory_space<vmem>>, vector<1x64xf32>
    %43 = vector.broadcast %42 : vector<1x64xf32> to vector<128x64xf32>
    %44 = arith.addf %41, %43 : vector<128x64xf32>
    %45 = arith.truncf %44 : vector<128x64xf32> to vector<128x64xbf16>
    %c0_39 = arith.constant 0 : index
    %c0_40 = arith.constant 0 : index
    %46 = vector.load %arg13[%c0_39, %c0_40] : memref<128x64xbf16, #tpu.memory_space<vmem>>, vector<128x64xbf16>
    tpu.vector_store %arg13[%c0_39, %c0_40], %45 {strides = array<i32>} : memref<128x64xbf16, #tpu.memory_space<vmem>>, vector<128x64xbf16>,
    return
  }
  func.func @transform_0(%arg0: i32) -> (i32, i32) {
    %c0_i32 = arith.constant 0 : i32
    %c0_i32_0 = arith.constant 0 : i32
    return %arg0, %c0_i32 : i32, i32
  }
  func.func @transform_1(%arg0: i32) -> (i32, i32) {
    %c0_i32 = arith.constant 0 : i32
    %c0_i32_0 = arith.constant 0 : i32
    return %arg0, %c0_i32 : i32, i32
  }
  func.func @transform_2(%arg0: i32) -> (i32, i32) {
    %c0_i32 = arith.constant 0 : i32
    %c0_i32_0 = arith.constant 0 : i32
    %c0_i32_1 = arith.constant 0 : i32
    return %c0_i32, %c0_i32_0 : i32, i32
  }
  func.func @transform_3(%arg0: i32) -> (i32, i32) {
    %c0_i32 = arith.constant 0 : i32
    %c0_i32_0 = arith.constant 0 : i32
    %c0_i32_1 = arith.constant 0 : i32
    return %c0_i32, %c0_i32_0 : i32, i32
  }
  func.func @transform_4(%arg0: i32) -> (i32, i32) {
    %c0_i32 = arith.constant 0 : i32
    %c0_i32_0 = arith.constant 0 : i32
    %c0_i32_1 = arith.constant 0 : i32
    return %c0_i32, %c0_i32_0 : i32, i32
  }
  func.func @transform_5(%arg0: i32) -> (i32, i32) {
    %c0_i32 = arith.constant 0 : i32
    %c0_i32_0 = arith.constant 0 : i32
    %c0_i32_1 = arith.constant 0 : i32
    return %c0_i32, %c0_i32_0 : i32, i32
  }
  func.func @transform_6(%arg0: i32) -> (i32, i32) {
    %c0_i32 = arith.constant 0 : i32
    %c0_i32_0 = arith.constant 0 : i32
    %c0_i32_1 = arith.constant 0 : i32
    return %c0_i32, %c0_i32_0 : i32, i32
  }
  func.func @transform_7(%arg0: i32) -> (i32, i32) {
    %c0_i32 = arith.constant 0 : i32
    %c0_i32_0 = arith.constant 0 : i32
    %c0_i32_1 = arith.constant 0 : i32
    return %c0_i32, %c0_i32_0 : i32, i32
  }
  func.func @transform_8(%arg0: i32) -> (i32, i32) {
    %c0_i32 = arith.constant 0 : i32
    %c0_i32_0 = arith.constant 0 : i32
    %c0_i32_1 = arith.constant 0 : i32
    return %c0_i32, %c0_i32_0 : i32, i32
  }
  func.func @transform_9(%arg0: i32) -> (i32, i32) {
    %c0_i32 = arith.constant 0 : i32
    %c0_i32_0 = arith.constant 0 : i32
    %c0_i32_1 = arith.constant 0 : i32
    return %c0_i32, %c0_i32_0 : i32, i32
  }
  func.func @transform_10(%arg0: i32) -> (i32, i32) {
    %c0_i32 = arith.constant 0 : i32
    %c0_i32_0 = arith.constant 0 : i32
    return %arg0, %c0_i32 : i32, i32
  }
  func.func @transform_11(%arg0: i32) -> (i32, i32) {
    %c0_i32 = arith.constant 0 : i32
    %c0_i32_0 = arith.constant 0 : i32
    return %arg0, %c0_i32 : i32, i32
  }
  func.func @transform_12(%arg0: i32) -> (i32, i32) {
    %c0_i32 = arith.constant 0 : i32
    %c0_i32_0 = arith.constant 0 : i32
    return %arg0, %c0_i32 : i32, i32
  }
}

</mosaic_0001>

<llo_original>
// kernel: gaan_forward.3
$region0: #{gaan_forward.3}
  #allocation0 [shape = 'u32[]', space=smem, size = 0x4, offset = 0x4, fixed_abs, tag = 'smem constant byte address 0x4 - core index']
  #allocation1 [shape = 'u32[144,128]{1,0:T(1,128)}', space=vmem, size = 0x12000, scoped, tag = 'internal scratch']
  %s0 = inlined_call_operand.vmem [shape: bf16[256,64], index: 0, kind: input, shape index: {}, may-alias: {0,1}]
  %s1 = inlined_call_operand.vmem [shape: bf16[256,64], index: 1, kind: input, shape index: {}, may-alias: {0,1}]
  %s2 = inlined_call_operand.vmem [shape: bf16[256,64], index: 2, kind: input, shape index: {}, may-alias: {2,3}]
  %s3 = inlined_call_operand.vmem [shape: bf16[256,64], index: 3, kind: input, shape index: {}, may-alias: {2,3}]
  %s4 = inlined_call_operand.hbm [shape: f32[256,256], index: 4, kind: output, shape index: {0}]
  %s5 = inlined_call_operand.hbm [shape: f32[256,256], index: 5, kind: output, shape index: {1}]
  %6 = xla_tuple %s4, %s5
  %s7 = sld [smem:[#allocation0]]
  $region57: #{gaan_forward.3} parent=0
    _
  %s9 = ssub.s32 1, %s7
  %s10 = scalar_select 0, %s9, %s7
  $region1: #{gaan_forward.3} parent=0
    #allocation2 [shape = 'u8[131072]{0}', space=vmem, size = 0x20000, scoped, tag = 'output window, operand 0']
    #allocation3 [shape = 's32[2]{0}', space=sflag, size = 0x8, scoped, tag = 'scoped memory for gaan_forward.3']
    #allocation4 [shape = 'u8[131072]{0}', space=vmem, size = 0x20000, scoped, tag = 'output window, operand 1']
    #allocation5 [shape = 's32[2]{0}', space=sflag, size = 0x8, scoped, tag = 'scoped memory for gaan_forward.3']
    %11 = vsyncpa [#allocation3], 0
    %s12 = scalar_lea.sflag [#allocation3], 1
    %13 = vsyncpa %s12, 0
    %14 = vsyncpa [#allocation5], 0
    %s15 = scalar_lea.sflag [#allocation5], 1
    %16 = vsyncpa %s15, 0
    loop: start=0, step=1, limit=6
    $region2: #{gaan_forward.3} parent=1 // loop_pre_header
      _
    $region3: #{gaan_forward.3} parent=1 // loop_header
      %s18 = sphi 0, %s22
      %p19 = scmp.ge.s32.totalorder %s18, 6
      %s25 = sphi 0, %s37
      %s26 = sphi 0, %s33
      %s27 = sphi 0, %s25
      %s28 = sphi 0, %s26
      %s29 = sphi 0, %s27
      %s30 = sphi 0, %s28
      %s40 = sphi 0, %s42
      %s43 = sphi 0, %s40
      %s44 = sphi 0, %s43
      %s60 = sphi 0, %s44
      %s66 = sphi 0, %s68
      %s69 = sphi 0, %s66
      %s70 = sphi 0, %s69
      %s86 = sphi 0, %s70
      %s92 = sphi 0, %s94
      %s95 = sphi 0, %s92
      %s96 = sphi 0, %s95
      %s112 = sphi 0, %s96
      %s118 = sphi 0, %s120
      %s121 = sphi 0, %s118
      %s122 = sphi 0, %s121
      %s138 = sphi 0, %s122
      %s146 = sphi 0, %s148
      %s149 = sphi 0, %s146
      %s150 = sphi 0, %s149
      %s166 = sphi 0, %s150
      %s174 = sphi 0, %s176
      %s177 = sphi 0, %s174
      %s178 = sphi 0, %s177
      %s194 = sphi 0, %s178
    $region4: #{gaan_forward.3} parent=1 // loop_header_branch
      %21 = sbr.rel (%p19) target = $region8
    $region5: #{gaan_forward.3} parent=1 // loop_body
      %s23 = ssub.s32 %s18, 1
      %s24 = ssub.s32 %s18, 2
      %s31 = sadd.s32 1, %s26
      %p32 = scmp.ge.s32.totalorder %s31, 2
      %s33 = scalar_select %p32, 0, %s31
      %s34 = sadd.s32 1, %s25
      %s35 = scalar_select %p32, %s34, %s25
      %p36 = scmp.ge.s32.totalorder %s35, 2
      %s37 = scalar_select %p36, 0, %s35
      %s38 = ssub.s32 %s25, %s37
      %p39 = scmp.eq.s32.totalorder %s38, 0
      %s41 = sadd.s32 %s40, 1
      %s42 = scalar_select %p39, %s40, %s41
      %p45 = pneg %p39
      %p46 = scmp.eq.s32.totalorder %s18, 3
      %p47 = por %p45, %p46
      %p48 = scmp.ne.s32.totalorder %s40, %s43
      %p49 = scmp.eq.s32.totalorder %s18, 0
      %p50 = por %p48, %p49
      %p51 = scmp.ne.s32.totalorder %s40, %s43
      %p52 = scmp.eq.s32.totalorder %s23, 3
      %p53 = por %p51, %p52
      %p54 = scmp.ne.s32.totalorder %s43, %s44
      %p55 = scmp.eq.s32.totalorder %s23, 0
      %p56 = por %p54, %p55
      %p57 = scmp.ne.s32.totalorder %s43, %s44
      %p58 = scmp.eq.s32.totalorder %s24, 3
      %p59 = por %p57, %p58
      %p61 = scmp.ne.s32.totalorder %s44, %s60
      %p62 = scmp.eq.s32.totalorder %s24, 0
      %p63 = por %p61, %p62
      %s64 = ssub.s32 %s26, %s33
      %p65 = scmp.eq.s32.totalorder %s64, 0
      %s67 = sadd.s32 %s66, 1
      %s68 = scalar_select %p65, %s66, %s67
      %p71 = pneg %p65
      %p72 = scmp.eq.s32.totalorder %s18, 3
      %p73 = por %p71, %p72
      %p74 = scmp.ne.s32.totalorder %s66, %s69
      %p75 = scmp.eq.s32.totalorder %s18, 0
      %p76 = por %p74, %p75
      %p77 = scmp.ne.s32.totalorder %s66, %s69
      %p78 = scmp.eq.s32.totalorder %s23, 3
      %p79 = por %p77, %p78
      %p80 = scmp.ne.s32.totalorder %s69, %s70
      %p81 = scmp.eq.s32.totalorder %s23, 0
      %p82 = por %p80, %p81
      %p83 = scmp.ne.s32.totalorder %s69, %s70
      %p84 = scmp.eq.s32.totalorder %s24, 3
      %p85 = por %p83, %p84
      %p87 = scmp.ne.s32.totalorder %s70, %s86
      %p88 = scmp.eq.s32.totalorder %s24, 0
      %p89 = por %p87, %p88
      %s90 = ssub.s32 %s25, %s37
      %p91 = scmp.eq.s32.totalorder %s90, 0
      %s93 = sadd.s32 %s92, 1
      %s94 = scalar_select %p91, %s92, %s93
      %p97 = pneg %p91
      %p98 = scmp.eq.s32.totalorder %s18, 3
      %p99 = por %p97, %p98
      %p100 = scmp.ne.s32.totalorder %s92, %s95
      %p101 = scmp.eq.s32.totalorder %s18, 0
      %p102 = por %p100, %p101
      %p103 = scmp.ne.s32.totalorder %s92, %s95
      %p104 = scmp.eq.s32.totalorder %s23, 3
      %p105 = por %p103, %p104
      %p106 = scmp.ne.s32.totalorder %s95, %s96
      %p107 = scmp.eq.s32.totalorder %s23, 0
      %p108 = por %p106, %p107
      %p109 = scmp.ne.s32.totalorder %s95, %s96
      %p110 = scmp.eq.s32.totalorder %s24, 3
      %p111 = por %p109, %p110
      %p113 = scmp.ne.s32.totalorder %s96, %s112
      %p114 = scmp.eq.s32.totalorder %s24, 0
      %p115 = por %p113, %p114
      %s116 = ssub.s32 %s26, %s33
      %p117 = scmp.eq.s32.totalorder %s116, 0
      %s119 = sadd.s32 %s118, 1
      %s120 = scalar_select %p117, %s118, %s119
      %p123 = pneg %p117
      %p124 = scmp.eq.s32.totalorder %s18, 3
      %p125 = por %p123, %p124
      %p126 = scmp.ne.s32.totalorder %s118, %s121
      %p127 = scmp.eq.s32.totalorder %s18, 0
      %p128 = por %p126, %p127
      %p129 = scmp.ne.s32.totalorder %s118, %s121
      %p130 = scmp.eq.s32.totalorder %s23, 3
      %p131 = por %p129, %p130
      %p132 = scmp.ne.s32.totalorder %s121, %s122
      %p133 = scmp.eq.s32.totalorder %s23, 0
      %p134 = por %p132, %p133
      %p135 = scmp.ne.s32.totalorder %s121, %s122
      %p136 = scmp.eq.s32.totalorder %s24, 3
      %p137 = por %p135, %p136
      %p139 = scmp.ne.s32.totalorder %s122, %s138
      %p140 = scmp.eq.s32.totalorder %s24, 0
      %p141 = por %p139, %p140
      %s142 = ssub.s32 %s25, %s37
      %s143 = ssub.s32 %s26, %s33
      %s144 = sor.u32 %s142, %s143
      %p145 = scmp.eq.s32.totalorder %s144, 0
      %s147 = sadd.s32 %s146, 1
      %s148 = scalar_select %p145, %s146, %s147
      %p151 = pneg %p145
      %p152 = scmp.eq.s32.totalorder %s18, 3
      %p153 = por %p151, %p152
      %p154 = scmp.ne.s32.totalorder %s146, %s149
      %p155 = scmp.eq.s32.totalorder %s18, 0
      %p156 = por %p154, %p155
      %p157 = scmp.ne.s32.totalorder %s146, %s149
      %p158 = scmp.eq.s32.totalorder %s23, 3
      %p159 = por %p157, %p158
      %p160 = scmp.ne.s32.totalorder %s149, %s150
      %p161 = scmp.eq.s32.totalorder %s23, 0
      %p162 = por %p160, %p161
      %p163 = scmp.ne.s32.totalorder %s149, %s150
      %p164 = scmp.eq.s32.totalorder %s24, 3
      %p165 = por %p163, %p164
      %p167 = scmp.ne.s32.totalorder %s150, %s166
      %p168 = scmp.eq.s32.totalorder %s24, 0
      %p169 = por %p167, %p168
      %s170 = ssub.s32 %s25, %s37
      %s171 = ssub.s32 %s26, %s33
      %s172 = sor.u32 %s170, %s171
      %p173 = scmp.eq.s32.totalorder %s172, 0
      %s175 = sadd.s32 %s174, 1
      %s176 = scalar_select %p173, %s174, %s175
      %p179 = pneg %p173
      %p180 = scmp.eq.s32.totalorder %s18, 3
      %p181 = por %p179, %p180
      %p182 = scmp.ne.s32.totalorder %s174, %s177
      %p183 = scmp.eq.s32.totalorder %s18, 0
      %p184 = por %p182, %p183
      %p185 = scmp.ne.s32.totalorder %s174, %s177
      %p186 = scmp.eq.s32.totalorder %s23, 3
      %p187 = por %p185, %p186
      %p188 = scmp.ne.s32.totalorder %s177, %s178
      %p189 = scmp.eq.s32.totalorder %s23, 0
      %p190 = por %p188, %p189
      %p191 = scmp.ne.s32.totalorder %s177, %s178
      %p192 = scmp.eq.s32.totalorder %s24, 3
      %p193 = por %p191, %p192
      %p195 = scmp.ne.s32.totalorder %s178, %s194
      %p196 = scmp.eq.s32.totalorder %s24, 0
      %p197 = por %p195, %p196
      %p198 = scmp.le.s32.totalorder 1, %s18
      %p199 = scmp.lt.s32.totalorder %s18, 5
      %p200 = pnand %p198, %p199
      %p201 = pneg %p200
      // Predicated region
      $region9: #{gaan_forward.3} parent=5 // pred_check
        _
      $region10: #{gaan_forward.3} parent=5 // pred_check_branch
        %203 = sbr.rel (%p200) target = $region12
      $region11: #{gaan_forward.3} parent=5 // pred_region
        %s204 = ssub.s32 %s18, 1
      $region12: #{gaan_forward.3} parent=5 // pred_fallthru
        _
      %p205 = scmp.lt.s32.totalorder %s18, 4
      // Predicated region
      $region13: #{gaan_forward.3} parent=5 // pred_check
        %p206 = pneg %p205
      $region14: #{gaan_forward.3} parent=5 // pred_check_branch
        %208 = sbr.rel (%p206) target = $region16
      $region15: #{gaan_forward.3} parent=5 // pred_region
        // Predicated region
        $region17: #{gaan_forward.3} parent=15 // pred_check
          %p209 = pneg %p50
        $region18: #{gaan_forward.3} parent=15 // pred_check_branch
          %211 = sbr.rel (%p209) target = $region20
        $region19: #{gaan_forward.3} parent=15 // pred_region
          %s212 = smul.u32 16, %s25
          %p213 = scmp.lt.s32.totalorder %s212, 31
          %s214 = scalar_select %p213, %s212, 31
          %s215 = smul.addr %s214, 4
          %s216 = scalar_lea.vmem %s0, %s215
          %s217 = smul.u32 16, %s25
        $region20: #{gaan_forward.3} parent=15 // pred_fallthru
          _
        // Predicated region
        $region21: #{gaan_forward.3} parent=15 // pred_check
          %p218 = pneg %p76
        $region22: #{gaan_forward.3} parent=15 // pred_check_branch
          %220 = sbr.rel (%p218) target = $region24
        $region23: #{gaan_forward.3} parent=15 // pred_region
          %s221 = smul.u32 16, %s26
          %p222 = scmp.lt.s32.totalorder %s221, 31
          %s223 = scalar_select %p222, %s221, 31
          %s224 = smul.addr %s223, 4
          %s225 = scalar_lea.vmem %s1, %s224
          %s226 = smul.u32 16, %s26
        $region24: #{gaan_forward.3} parent=15 // pred_fallthru
          _
        // Predicated region
        $region25: #{gaan_forward.3} parent=15 // pred_check
          %p227 = pneg %p102
        $region26: #{gaan_forward.3} parent=15 // pred_check_branch
          %229 = sbr.rel (%p227) target = $region28
        $region27: #{gaan_forward.3} parent=15 // pred_region
          %s230 = smul.u32 16, %s25
          %p231 = scmp.lt.s32.totalorder %s230, 31
          %s232 = scalar_select %p231, %s230, 31
          %s233 = smul.addr %s232, 4
          %s234 = scalar_lea.vmem %s2, %s233
          %s235 = smul.u32 16, %s25
        $region28: #{gaan_forward.3} parent=15 // pred_fallthru
          _
        // Predicated region
        $region29: #{gaan_forward.3} parent=15 // pred_check
          %p236 = pneg %p128
        $region30: #{gaan_forward.3} parent=15 // pred_check_branch
          %238 = sbr.rel (%p236) target = $region32
        $region31: #{gaan_forward.3} parent=15 // pred_region
          %s239 = smul.u32 16, %s26
          %p240 = scmp.lt.s32.totalorder %s239, 31
          %s241 = scalar_select %p240, %s239, 31
          %s242 = smul.addr %s241, 4
          %s243 = scalar_lea.vmem %s3, %s242
          %s244 = smul.u32 16, %s26
        $region32: #{gaan_forward.3} parent=15 // pred_fallthru
          _
      $region16: #{gaan_forward.3} parent=5 // pred_fallthru
        _
      %p245 = scmp.le.s32.totalorder 1, %s18
      %p246 = scmp.lt.s32.totalorder %s18, 5
      %p247 = pnand %p245, %p246
      %p248 = pneg %p247
      // Predicated region
      $region33: #{gaan_forward.3} parent=5 // pred_check
        _
      $region34: #{gaan_forward.3} parent=5 // pred_check_branch
        %250 = sbr.rel (%p247) target = $region36
      $region35: #{gaan_forward.3} parent=5 // pred_region
        %s251 = ssub.s32 %s18, 1
        %s252 = smul.u32 16, %s27
        %p253 = scmp.lt.s32.totalorder %s252, 31
        %s254 = scalar_select %p253, %s252, 31
        %s255 = smul.addr %s254, 4
        %s256 = scalar_lea.vmem %s0, %s255
        %p257 = pneg %p56
        %p258 = pneg %p53
        %s259 = smul.u32 16, %s28
        %p260 = scmp.lt.s32.totalorder %s259, 31
        %s261 = scalar_select %p260, %s259, 31
        %s262 = smul.addr %s261, 4
        %s263 = scalar_lea.vmem %s1, %s262
        %p264 = pneg %p82
        %p265 = pneg %p79
        %s266 = smul.u32 16, %s27
        %p267 = scmp.lt.s32.totalorder %s266, 31
        %s268 = scalar_select %p267, %s266, 31
        %s269 = smul.addr %s268, 4
        %s270 = scalar_lea.vmem %s2, %s269
        %p271 = pneg %p108
        %p272 = pneg %p105
        %s273 = smul.u32 16, %s28
        %p274 = scmp.lt.s32.totalorder %s273, 31
        %s275 = scalar_select %p274, %s273, 31
        %s276 = smul.addr %s275, 4
        %s277 = scalar_lea.vmem %s3, %s276
        %p278 = pneg %p134
        %p279 = pneg %p131
        %p280 = pneg %p162
        %p281 = pneg %p159
        %s282 = sand.u32 %s149, 1
        %s283 = scalar_lea.sflag [#allocation3], %s282
        %s284 = sand.u32 %s149, 1
        %s285 = smul.addr %s284, 128
        %s286 = scalar_lea.vmem [#allocation2], %s285
        %p287 = pneg %p190
        %p288 = pneg %p187
        %s289 = sand.u32 %s177, 1
        %s290 = scalar_lea.sflag [#allocation5], %s289
        %s291 = sand.u32 %s177, 1
        %s292 = smul.addr %s291, 128
        %s293 = scalar_lea.vmem [#allocation4], %s292
        %s294 = smul.u32 16, %s27
        %p295 = scmp.lt.s32.totalorder %s294, 31
        %s296 = scalar_select %p295, %s294, 31
        %s297 = smul.addr %s296, 4
        %s298 = scalar_lea.vmem %s0, %s297
        %s299 = smul.u32 16, %s27
        %s300 = smul.u32 16, %s28
        %p301 = scmp.lt.s32.totalorder %s300, 31
        %s302 = scalar_select %p301, %s300, 31
        %s303 = smul.addr %s302, 4
        %s304 = scalar_lea.vmem %s1, %s303
        %s305 = smul.u32 16, %s28
        %s306 = smul.u32 16, %s27
        %p307 = scmp.lt.s32.totalorder %s306, 31
        %s308 = scalar_select %p307, %s306, 31
        %s309 = smul.addr %s308, 4
        %s310 = scalar_lea.vmem %s2, %s309
        %s311 = smul.u32 16, %s27
        %s312 = smul.u32 16, %s28
        %p313 = scmp.lt.s32.totalorder %s312, 31
        %s314 = scalar_select %p313, %s312, 31
        %s315 = smul.addr %s314, 4
        %s316 = scalar_lea.vmem %s3, %s315
        %s317 = smul.u32 16, %s28
        %s318 = smul.u32 16, %s27
        %s319 = smul.u32 16, %s27
        %v321 = vld [vmem:[%s298] sm:$0xf]
        %v322 = vld [vmem:[%s298 + $0x4] sm:$0xf]
        %v323 = vld [vmem:[%s298 + $0x8] sm:$0xf]
        %v324 = vld [vmem:[%s298 + $0xc] sm:$0xf]
        %v325 = vld [vmem:[%s298 + $0x10] sm:$0xf]
        %v326 = vld [vmem:[%s298 + $0x14] sm:$0xf]
        %v327 = vld [vmem:[%s298 + $0x18] sm:$0xf]
        %v328 = vld [vmem:[%s298 + $0x1c] sm:$0xf]
        %v329 = vld [vmem:[%s298 + $0x20] sm:$0xf]
        %v330 = vld [vmem:[%s298 + $0x24] sm:$0xf]
        %v331 = vld [vmem:[%s298 + $0x28] sm:$0xf]
        %v332 = vld [vmem:[%s298 + $0x2c] sm:$0xf]
        %v333 = vld [vmem:[%s298 + $0x30] sm:$0xf]
        %v334 = vld [vmem:[%s298 + $0x34] sm:$0xf]
        %v335 = vld [vmem:[%s298 + $0x38] sm:$0xf]
        %v336 = vld [vmem:[%s298 + $0x3c] sm:$0xf]
        %v337 = vld [vmem:[%s304] sm:$0xf]
        %v338 = vld [vmem:[%s304 + $0x4] sm:$0xf]
        %v339 = vld [vmem:[%s304 + $0x8] sm:$0xf]
        %v340 = vld [vmem:[%s304 + $0xc] sm:$0xf]
        %v341 = vld [vmem:[%s304 + $0x10] sm:$0xf]
        %v342 = vld [vmem:[%s304 + $0x14] sm:$0xf]
        %v343 = vld [vmem:[%s304 + $0x18] sm:$0xf]
        %v344 = vld [vmem:[%s304 + $0x1c] sm:$0xf]
        %v345 = vld [vmem:[%s304 + $0x20] sm:$0xf]
        %v346 = vld [vmem:[%s304 + $0x24] sm:$0xf]
        %v347 = vld [vmem:[%s304 + $0x28] sm:$0xf]
        %v348 = vld [vmem:[%s304 + $0x2c] sm:$0xf]
        %v349 = vld [vmem:[%s304 + $0x30] sm:$0xf]
        %v350 = vld [vmem:[%s304 + $0x34] sm:$0xf]
        %v351 = vld [vmem:[%s304 + $0x38] sm:$0xf]
        %v352 = vld [vmem:[%s304 + $0x3c] sm:$0xf]
        %v369 = vunpack.c.l.b16 %v321
        %v370 = vunpack.c.l.b16 %v322
        %v371 = vunpack.c.l.b16 %v323
        %v372 = vunpack.c.l.b16 %v324
        %v373 = vunpack.c.l.b16 %v325
        %v374 = vunpack.c.l.b16 %v326
        %v375 = vunpack.c.l.b16 %v327
        %v376 = vunpack.c.l.b16 %v328
        %v377 = vunpack.c.l.b16 %v329
        %v378 = vunpack.c.l.b16 %v330
        %v379 = vunpack.c.l.b16 %v331
        %v380 = vunpack.c.l.b16 %v332
        %v381 = vunpack.c.l.b16 %v333
        %v382 = vunpack.c.l.b16 %v334
        %v383 = vunpack.c.l.b16 %v335
        %v384 = vunpack.c.l.b16 %v336
        %v385 = vpack.c.b16 %v370, %v369
        %v386 = vpack.c.b16 %v372, %v371
        %v387 = vpack.c.b16 %v374, %v373
        %v388 = vpack.c.b16 %v376, %v375
        %v389 = vpack.c.b16 %v378, %v377
        %v390 = vpack.c.b16 %v380, %v379
        %v391 = vpack.c.b16 %v382, %v381
        %v392 = vpack.c.b16 %v384, %v383
        %v409 = vunpack.c.l.b16 %v337
        %v410 = vunpack.c.l.b16 %v338
        %v411 = vunpack.c.l.b16 %v339
        %v412 = vunpack.c.l.b16 %v340
        %v413 = vunpack.c.l.b16 %v341
        %v414 = vunpack.c.l.b16 %v342
        %v415 = vunpack.c.l.b16 %v343
        %v416 = vunpack.c.l.b16 %v344
        %v417 = vunpack.c.l.b16 %v345
        %v418 = vunpack.c.l.b16 %v346
        %v419 = vunpack.c.l.b16 %v347
        %v420 = vunpack.c.l.b16 %v348
        %v421 = vunpack.c.l.b16 %v349
        %v422 = vunpack.c.l.b16 %v350
        %v423 = vunpack.c.l.b16 %v351
        %v424 = vunpack.c.l.b16 %v352
        %v425 = vpack.c.b16 %v410, %v409
        %v426 = vpack.c.b16 %v412, %v411
        %v427 = vpack.c.b16 %v414, %v413
        %v428 = vpack.c.b16 %v416, %v415
        %v429 = vpack.c.b16 %v418, %v417
        %v430 = vpack.c.b16 %v420, %v419
        %v431 = vpack.c.b16 %v422, %v421
        %v432 = vpack.c.b16 %v424, %v423
        %vm433 = vcmask 523264
        %v435 = vsel %vm433, %v385, 0
        %v438 = vsel %vm433, %v386, 0
        %v441 = vsel %vm433, %v387, 0
        %v444 = vsel %vm433, %v388, 0
        %v447 = vsel %vm433, %v389, 0
        %v450 = vsel %vm433, %v390, 0
        %v453 = vsel %vm433, %v391, 0
        %v456 = vsel %vm433, %v392, 0
        %v459 = vsel %vm433, %v425, 0
        %v462 = vsel %vm433, %v426, 0
        %v465 = vsel %vm433, %v427, 0
        %v468 = vsel %vm433, %v428, 0
        %v471 = vsel %vm433, %v429, 0
        %v474 = vsel %vm433, %v430, 0
        %v477 = vsel %vm433, %v431, 0
        %v480 = vsel %vm433, %v432, 0
        %482 = vmatprep.subr.bf16.mxu0 0
        %483 = vmatpush1.bf16.xpose.msra.mxu0 %v480
        %484 = vmatprep.subr.bf16.mxu0 0
        %485 = vmatpush1.bf16.xpose.msra.mxu0 %v477
        %486 = vmatprep.subr.bf16.mxu0 0
        %487 = vmatpush1.bf16.xpose.msra.mxu0 %v474
        %488 = vmatprep.subr.bf16.mxu0 0
        %489 = vmatpush1.bf16.xpose.msra.mxu0 %v471
        %490 = vmatprep.subr.bf16.mxu0 0
        %491 = vmatpush1.bf16.xpose.msra.mxu0 %v468
        %492 = vmatprep.subr.bf16.mxu0 0
        %493 = vmatpush1.bf16.xpose.msra.mxu0 %v465
        %494 = vmatprep.subr.bf16.mxu0 0
        %495 = vmatpush1.bf16.xpose.msra.mxu0 %v462
        %496 = vmatprep.subr.bf16.mxu0 0
        %497 = vmatpush1.bf16.xpose.msra.mxu0 %v459
        %498 = vmatprep.subr.bf16.mxu0 0
        %499 = vmatpush2.bf16.xpose.msra.mxu0 0
        %500 = vmatprep.subr.bf16.mxu0 0
        %501 = vmatpush2.bf16.xpose.msra.mxu0 0
        %502 = vmatprep.subr.bf16.mxu0 0
        %503 = vmatpush2.bf16.xpose.msra.mxu0 0
        %504 = vmatprep.subr.bf16.mxu0 0
        %505 = vmatpush2.bf16.xpose.msra.mxu0 0
        %506 = vmatprep.subr.bf16.mxu0 0
        %507 = vmatpush2.bf16.xpose.msra.mxu0 0
        %508 = vmatprep.subr.bf16.mxu0 0
        %509 = vmatpush2.bf16.xpose.msra.mxu0 0
        %510 = vmatprep.subr.bf16.mxu0 0
        %511 = vmatpush2.bf16.xpose.msra.mxu0 0
        %512 = vmatprep.subr.bf16.mxu0 0
        %513 = vmatpush2.bf16.xpose.msra.mxu0 0
        %514 = vmatprep.mubr.bf16.mxu0 0
        %515 = vmatmul.mubr.bf16.gmra.mxu0 %v435
        %v516 = vpop.f32.mrf.mxu0
        %v517 = vadd.f32 0.0, %v516
        %v518 = vpop.f32.mrf.mxu0
        %v519 = vpop.f32.mrf.mxu0
        %v520 = vadd.f32 0.0, %v519
        %v521 = vpop.f32.mrf.mxu0
        %522 = vmatprep.mubr.bf16.mxu0 0
        %523 = vmatmul.mubr.bf16.gmra.mxu0 %v438
        %v524 = vpop.f32.mrf.mxu0
        %v525 = vadd.f32 0.0, %v524
        %v526 = vpop.f32.mrf.mxu0
        %v527 = vpop.f32.mrf.mxu0
        %v528 = vadd.f32 0.0, %v527
        %v529 = vpop.f32.mrf.mxu0
        %530 = vmatprep.mubr.bf16.mxu0 0
        %531 = vmatmul.mubr.bf16.gmra.mxu0 %v441
        %v532 = vpop.f32.mrf.mxu0
        %v533 = vadd.f32 0.0, %v532
        %v534 = vpop.f32.mrf.mxu0
        %v535 = vpop.f32.mrf.mxu0
        %v536 = vadd.f32 0.0, %v535
        %v537 = vpop.f32.mrf.mxu0
        %538 = vmatprep.mubr.bf16.mxu0 0
        %539 = vmatmul.mubr.bf16.gmra.mxu0 %v444
        %v540 = vpop.f32.mrf.mxu0
        %v541 = vadd.f32 0.0, %v540
        %v542 = vpop.f32.mrf.mxu0
        %v543 = vpop.f32.mrf.mxu0
        %v544 = vadd.f32 0.0, %v543
        %v545 = vpop.f32.mrf.mxu0
        %546 = vmatprep.mubr.bf16.mxu0 0
        %547 = vmatmul.mubr.bf16.gmra.mxu0 %v447
        %v548 = vpop.f32.mrf.mxu0
        %v549 = vadd.f32 0.0, %v548
        %v550 = vpop.f32.mrf.mxu0
        %v551 = vpop.f32.mrf.mxu0
        %v552 = vadd.f32 0.0, %v551
        %v553 = vpop.f32.mrf.mxu0
        %554 = vmatprep.mubr.bf16.mxu0 0
        %555 = vmatmul.mubr.bf16.gmra.mxu0 %v450
        %v556 = vpop.f32.mrf.mxu0
        %v557 = vadd.f32 0.0, %v556
        %v558 = vpop.f32.mrf.mxu0
        %v559 = vpop.f32.mrf.mxu0
        %v560 = vadd.f32 0.0, %v559
        %v561 = vpop.f32.mrf.mxu0
        %562 = vmatprep.mubr.bf16.mxu0 0
        %563 = vmatmul.mubr.bf16.gmra.mxu0 %v453
        %v564 = vpop.f32.mrf.mxu0
        %v565 = vadd.f32 0.0, %v564
        %v566 = vpop.f32.mrf.mxu0
        %v567 = vpop.f32.mrf.mxu0
        %v568 = vadd.f32 0.0, %v567
        %v569 = vpop.f32.mrf.mxu0
        %570 = vmatprep.mubr.bf16.mxu0 0
        %571 = vmatmul.mubr.bf16.gmra.mxu0 %v456
        %v572 = vpop.f32.mrf.mxu0
        %v573 = vadd.f32 0.0, %v572
        %v574 = vpop.f32.mrf.mxu0
        %v575 = vpop.f32.mrf.mxu0
        %v576 = vadd.f32 0.0, %v575
        %v577 = vpop.f32.mrf.mxu0
        %578 = vdwg.mxu0
        %v579 = vxor.u32 %v517, 2147483648
        %v580 = vxor.u32 %v520, 2147483648
        %v581 = vxor.u32 %v525, 2147483648
        %v582 = vxor.u32 %v528, 2147483648
        %v583 = vxor.u32 %v533, 2147483648
        %v584 = vxor.u32 %v536, 2147483648
        %v585 = vxor.u32 %v541, 2147483648
        %v586 = vxor.u32 %v544, 2147483648
        %v587 = vxor.u32 %v549, 2147483648
        %v588 = vxor.u32 %v552, 2147483648
        %v589 = vxor.u32 %v557, 2147483648
        %v590 = vxor.u32 %v560, 2147483648
        %v591 = vxor.u32 %v565, 2147483648
        %v592 = vxor.u32 %v568, 2147483648
        %v593 = vxor.u32 %v573, 2147483648
        %v594 = vxor.u32 %v576, 2147483648
        %v595 = vmul.f32 %v579, 1.442695
        %v596 = vpow.pop %v595
        %v597 = vmul.f32 %v580, 1.442695
        %v598 = vpow.pop %v597
        %v599 = vmul.f32 %v581, 1.442695
        %v600 = vpow.pop %v599
        %v601 = vmul.f32 %v582, 1.442695
        %v602 = vpow.pop %v601
        %v603 = vmul.f32 %v583, 1.442695
        %v604 = vpow.pop %v603
        %v605 = vmul.f32 %v584, 1.442695
        %v606 = vpow.pop %v605
        %v607 = vmul.f32 %v585, 1.442695
        %v608 = vpow.pop %v607
        %v609 = vmul.f32 %v586, 1.442695
        %v610 = vpow.pop %v609
        %v611 = vmul.f32 %v587, 1.442695
        %v612 = vpow.pop %v611
        %v613 = vmul.f32 %v588, 1.442695
        %v614 = vpow.pop %v613
        %v615 = vmul.f32 %v589, 1.442695
        %v616 = vpow.pop %v615
        %v617 = vmul.f32 %v590, 1.442695
        %v618 = vpow.pop %v617
        %v619 = vmul.f32 %v591, 1.442695
        %v620 = vpow.pop %v619
        %v621 = vmul.f32 %v592, 1.442695
        %v622 = vpow.pop %v621
        %v623 = vmul.f32 %v593, 1.442695
        %v624 = vpow.pop %v623
        %v625 = vmul.f32 %v594, 1.442695
        %v626 = vpow.pop %v625
        %v627 = vadd.f32 %v596, 1.0
        %v628 = vadd.f32 %v598, 1.0
        %v629 = vadd.f32 %v600, 1.0
        %v630 = vadd.f32 %v602, 1.0
        %v631 = vadd.f32 %v604, 1.0
        %v632 = vadd.f32 %v606, 1.0
        %v633 = vadd.f32 %v608, 1.0
        %v634 = vadd.f32 %v610, 1.0
        %v635 = vadd.f32 %v612, 1.0
        %v636 = vadd.f32 %v614, 1.0
        %v637 = vadd.f32 %v616, 1.0
        %v638 = vadd.f32 %v618, 1.0
        %v639 = vadd.f32 %v620, 1.0
        %v640 = vadd.f32 %v622, 1.0
        %v641 = vadd.f32 %v624, 1.0
        %v642 = vadd.f32 %v626, 1.0
        %v643 = vrcp.pop %v627
        %v644 = vmul.f32 1.0, %v643
        %v645 = vrcp.pop %v628
        %v646 = vmul.f32 1.0, %v645
        %v647 = vrcp.pop %v629
        %v648 = vmul.f32 1.0, %v647
        %v649 = vrcp.pop %v630
        %v650 = vmul.f32 1.0, %v649
        %v651 = vrcp.pop %v631
        %v652 = vmul.f32 1.0, %v651
        %v653 = vrcp.pop %v632
        %v654 = vmul.f32 1.0, %v653
        %v655 = vrcp.pop %v633
        %v656 = vmul.f32 1.0, %v655
        %v657 = vrcp.pop %v634
        %v658 = vmul.f32 1.0, %v657
        %v659 = vrcp.pop %v635
        %v660 = vmul.f32 1.0, %v659
        %v661 = vrcp.pop %v636
        %v662 = vmul.f32 1.0, %v661
        %v663 = vrcp.pop %v637
        %v664 = vmul.f32 1.0, %v663
        %v665 = vrcp.pop %v638
        %v666 = vmul.f32 1.0, %v665
        %v667 = vrcp.pop %v639
        %v668 = vmul.f32 1.0, %v667
        %v669 = vrcp.pop %v640
        %v670 = vmul.f32 1.0, %v669
        %v671 = vrcp.pop %v641
        %v672 = vmul.f32 1.0, %v671
        %v673 = vrcp.pop %v642
        %v674 = vmul.f32 1.0, %v673
        %675 = vst [vmem:[%s286] sm:$0xff] %v644
        %676 = vst [vmem:[%s286 + $0x8] sm:$0xff] %v646
        %677 = vst [vmem:[%s286 + $0x10] sm:$0xff] %v648
        %678 = vst [vmem:[%s286 + $0x18] sm:$0xff] %v650
        %679 = vst [vmem:[%s286 + $0x20] sm:$0xff] %v652
        %680 = vst [vmem:[%s286 + $0x28] sm:$0xff] %v654
        %681 = vst [vmem:[%s286 + $0x30] sm:$0xff] %v656
        %682 = vst [vmem:[%s286 + $0x38] sm:$0xff] %v658
        %683 = vst [vmem:[%s286 + $0x40] sm:$0xff] %v660
        %684 = vst [vmem:[%s286 + $0x48] sm:$0xff] %v662
        %685 = vst [vmem:[%s286 + $0x50] sm:$0xff] %v664
        %686 = vst [vmem:[%s286 + $0x58] sm:$0xff] %v666
        %687 = vst [vmem:[%s286 + $0x60] sm:$0xff] %v668
        %688 = vst [vmem:[%s286 + $0x68] sm:$0xff] %v670
        %689 = vst [vmem:[%s286 + $0x70] sm:$0xff] %v672
        %690 = vst [vmem:[%s286 + $0x78] sm:$0xff] %v674
        %v691 = vld [vmem:[%s310] sm:$0xf]
        %v692 = vld [vmem:[%s310 + $0x4] sm:$0xf]
        %v693 = vld [vmem:[%s310 + $0x8] sm:$0xf]
        %v694 = vld [vmem:[%s310 + $0xc] sm:$0xf]
        %v695 = vld [vmem:[%s310 + $0x10] sm:$0xf]
        %v696 = vld [vmem:[%s310 + $0x14] sm:$0xf]
        %v697 = vld [vmem:[%s310 + $0x18] sm:$0xf]
        %v698 = vld [vmem:[%s310 + $0x1c] sm:$0xf]
        %v699 = vld [vmem:[%s310 + $0x20] sm:$0xf]
        %v700 = vld [vmem:[%s310 + $0x24] sm:$0xf]
        %v701 = vld [vmem:[%s310 + $0x28] sm:$0xf]
        %v702 = vld [vmem:[%s310 + $0x2c] sm:$0xf]
        %v703 = vld [vmem:[%s310 + $0x30] sm:$0xf]
        %v704 = vld [vmem:[%s310 + $0x34] sm:$0xf]
        %v705 = vld [vmem:[%s310 + $0x38] sm:$0xf]
        %v706 = vld [vmem:[%s310 + $0x3c] sm:$0xf]
        %v707 = vld [vmem:[%s316] sm:$0xf]
        %v708 = vld [vmem:[%s316 + $0x4] sm:$0xf]
        %v709 = vld [vmem:[%s316 + $0x8] sm:$0xf]
        %v710 = vld [vmem:[%s316 + $0xc] sm:$0xf]
        %v711 = vld [vmem:[%s316 + $0x10] sm:$0xf]
        %v712 = vld [vmem:[%s316 + $0x14] sm:$0xf]
        %v713 = vld [vmem:[%s316 + $0x18] sm:$0xf]
        %v714 = vld [vmem:[%s316 + $0x1c] sm:$0xf]
        %v715 = vld [vmem:[%s316 + $0x20] sm:$0xf]
        %v716 = vld [vmem:[%s316 + $0x24] sm:$0xf]
        %v717 = vld [vmem:[%s316 + $0x28] sm:$0xf]
        %v718 = vld [vmem:[%s316 + $0x2c] sm:$0xf]
        %v719 = vld [vmem:[%s316 + $0x30] sm:$0xf]
        %v720 = vld [vmem:[%s316 + $0x34] sm:$0xf]
        %v721 = vld [vmem:[%s316 + $0x38] sm:$0xf]
        %v722 = vld [vmem:[%s316 + $0x3c] sm:$0xf]
        %v739 = vunpack.c.l.b16 %v691
        %v740 = vunpack.c.l.b16 %v692
        %v741 = vunpack.c.l.b16 %v693
        %v742 = vunpack.c.l.b16 %v694
        %v743 = vunpack.c.l.b16 %v695
        %v744 = vunpack.c.l.b16 %v696
        %v745 = vunpack.c.l.b16 %v697
        %v746 = vunpack.c.l.b16 %v698
        %v747 = vunpack.c.l.b16 %v699
        %v748 = vunpack.c.l.b16 %v700
        %v749 = vunpack.c.l.b16 %v701
        %v750 = vunpack.c.l.b16 %v702
        %v751 = vunpack.c.l.b16 %v703
        %v752 = vunpack.c.l.b16 %v704
        %v753 = vunpack.c.l.b16 %v705
        %v754 = vunpack.c.l.b16 %v706
        %v755 = vpack.c.b16 %v740, %v739
        %v756 = vpack.c.b16 %v742, %v741
        %v757 = vpack.c.b16 %v744, %v743
        %v758 = vpack.c.b16 %v746, %v745
        %v759 = vpack.c.b16 %v748, %v747
        %v760 = vpack.c.b16 %v750, %v749
        %v761 = vpack.c.b16 %v752, %v751
        %v762 = vpack.c.b16 %v754, %v753
        %v779 = vunpack.c.l.b16 %v707
        %v780 = vunpack.c.l.b16 %v708
        %v781 = vunpack.c.l.b16 %v709
        %v782 = vunpack.c.l.b16 %v710
        %v783 = vunpack.c.l.b16 %v711
        %v784 = vunpack.c.l.b16 %v712
        %v785 = vunpack.c.l.b16 %v713
        %v786 = vunpack.c.l.b16 %v714
        %v787 = vunpack.c.l.b16 %v715
        %v788 = vunpack.c.l.b16 %v716
        %v789 = vunpack.c.l.b16 %v717
        %v790 = vunpack.c.l.b16 %v718
        %v791 = vunpack.c.l.b16 %v719
        %v792 = vunpack.c.l.b16 %v720
        %v793 = vunpack.c.l.b16 %v721
        %v794 = vunpack.c.l.b16 %v722
        %v795 = vpack.c.b16 %v780, %v779
        %v796 = vpack.c.b16 %v782, %v781
        %v797 = vpack.c.b16 %v784, %v783
        %v798 = vpack.c.b16 %v786, %v785
        %v799 = vpack.c.b16 %v788, %v787
        %v800 = vpack.c.b16 %v790, %v789
        %v801 = vpack.c.b16 %v792, %v791
        %v802 = vpack.c.b16 %v794, %v793
        %v804 = vsel %vm433, %v755, 0
        %v807 = vsel %vm433, %v756, 0
        %v810 = vsel %vm433, %v757, 0
        %v813 = vsel %vm433, %v758, 0
        %v816 = vsel %vm433, %v759, 0
        %v819 = vsel %vm433, %v760, 0
        %v822 = vsel %vm433, %v761, 0
        %v825 = vsel %vm433, %v762, 0
        %v828 = vsel %vm433, %v795, 0
        %v831 = vsel %vm433, %v796, 0
        %v834 = vsel %vm433, %v797, 0
        %v837 = vsel %vm433, %v798, 0
        %v840 = vsel %vm433, %v799, 0
        %v843 = vsel %vm433, %v800, 0
        %v846 = vsel %vm433, %v801, 0
        %v849 = vsel %vm433, %v802, 0
        %851 = vmatprep.subr.bf16.mxu0 0
        %852 = vmatpush1.bf16.xpose.msra.mxu0 %v849
        %853 = vmatprep.subr.bf16.mxu0 0
        %854 = vmatpush1.bf16.xpose.msra.mxu0 %v846
        %855 = vmatprep.subr.bf16.mxu0 0
        %856 = vmatpush1.bf16.xpose.msra.mxu0 %v843
        %857 = vmatprep.subr.bf16.mxu0 0
        %858 = vmatpush1.bf16.xpose.msra.mxu0 %v840
        %859 = vmatprep.subr.bf16.mxu0 0
        %860 = vmatpush1.bf16.xpose.msra.mxu0 %v837
        %861 = vmatprep.subr.bf16.mxu0 0
        %862 = vmatpush1.bf16.xpose.msra.mxu0 %v834
        %863 = vmatprep.subr.bf16.mxu0 0
        %864 = vmatpush1.bf16.xpose.msra.mxu0 %v831
        %865 = vmatprep.subr.bf16.mxu0 0
        %866 = vmatpush1.bf16.xpose.msra.mxu0 %v828
        %867 = vmatprep.subr.bf16.mxu0 0
        %868 = vmatpush2.bf16.xpose.msra.mxu0 0
        %869 = vmatprep.subr.bf16.mxu0 0
        %870 = vmatpush2.bf16.xpose.msra.mxu0 0
        %871 = vmatprep.subr.bf16.mxu0 0
        %872 = vmatpush2.bf16.xpose.msra.mxu0 0
        %873 = vmatprep.subr.bf16.mxu0 0
        %874 = vmatpush2.bf16.xpose.msra.mxu0 0
        %875 = vmatprep.subr.bf16.mxu0 0
        %876 = vmatpush2.bf16.xpose.msra.mxu0 0
        %877 = vmatprep.subr.bf16.mxu0 0
        %878 = vmatpush2.bf16.xpose.msra.mxu0 0
        %879 = vmatprep.subr.bf16.mxu0 0
        %880 = vmatpush2.bf16.xpose.msra.mxu0 0
        %881 = vmatprep.subr.bf16.mxu0 0
        %882 = vmatpush2.bf16.xpose.msra.mxu0 0
        %883 = vmatprep.mubr.bf16.mxu0 0
        %884 = vmatmul.mubr.bf16.gmra.mxu0 %v804
        %v885 = vpop.f32.mrf.mxu0
        %v886 = vadd.f32 0.0, %v885
        %v887 = vpop.f32.mrf.mxu0
        %v888 = vpop.f32.mrf.mxu0
        %v889 = vadd.f32 0.0, %v888
        %v890 = vpop.f32.mrf.mxu0
        %891 = vmatprep.mubr.bf16.mxu0 0
        %892 = vmatmul.mubr.bf16.gmra.mxu0 %v807
        %v893 = vpop.f32.mrf.mxu0
        %v894 = vadd.f32 0.0, %v893
        %v895 = vpop.f32.mrf.mxu0
        %v896 = vpop.f32.mrf.mxu0
        %v897 = vadd.f32 0.0, %v896
        %v898 = vpop.f32.mrf.mxu0
        %899 = vmatprep.mubr.bf16.mxu0 0
        %900 = vmatmul.mubr.bf16.gmra.mxu0 %v810
        %v901 = vpop.f32.mrf.mxu0
        %v902 = vadd.f32 0.0, %v901
        %v903 = vpop.f32.mrf.mxu0
        %v904 = vpop.f32.mrf.mxu0
        %v905 = vadd.f32 0.0, %v904
        %v906 = vpop.f32.mrf.mxu0
        %907 = vmatprep.mubr.bf16.mxu0 0
        %908 = vmatmul.mubr.bf16.gmra.mxu0 %v813
        %v909 = vpop.f32.mrf.mxu0
        %v910 = vadd.f32 0.0, %v909
        %v911 = vpop.f32.mrf.mxu0
        %v912 = vpop.f32.mrf.mxu0
        %v913 = vadd.f32 0.0, %v912
        %v914 = vpop.f32.mrf.mxu0
        %915 = vmatprep.mubr.bf16.mxu0 0
        %916 = vmatmul.mubr.bf16.gmra.mxu0 %v816
        %v917 = vpop.f32.mrf.mxu0
        %v918 = vadd.f32 0.0, %v917
        %v919 = vpop.f32.mrf.mxu0
        %v920 = vpop.f32.mrf.mxu0
        %v921 = vadd.f32 0.0, %v920
        %v922 = vpop.f32.mrf.mxu0
        %923 = vmatprep.mubr.bf16.mxu0 0
        %924 = vmatmul.mubr.bf16.gmra.mxu0 %v819
        %v925 = vpop.f32.mrf.mxu0
        %v926 = vadd.f32 0.0, %v925
        %v927 = vpop.f32.mrf.mxu0
        %v928 = vpop.f32.mrf.mxu0
        %v929 = vadd.f32 0.0, %v928
        %v930 = vpop.f32.mrf.mxu0
        %931 = vmatprep.mubr.bf16.mxu0 0
        %932 = vmatmul.mubr.bf16.gmra.mxu0 %v822
        %v933 = vpop.f32.mrf.mxu0
        %v934 = vadd.f32 0.0, %v933
        %v935 = vpop.f32.mrf.mxu0
        %v936 = vpop.f32.mrf.mxu0
        %v937 = vadd.f32 0.0, %v936
        %v938 = vpop.f32.mrf.mxu0
        %939 = vmatprep.mubr.bf16.mxu0 0
        %940 = vmatmul.mubr.bf16.gmra.mxu0 %v825
        %v941 = vpop.f32.mrf.mxu0
        %v942 = vadd.f32 0.0, %v941
        %v943 = vpop.f32.mrf.mxu0
        %v944 = vpop.f32.mrf.mxu0
        %v945 = vadd.f32 0.0, %v944
        %v946 = vpop.f32.mrf.mxu0
        %947 = vdwg.mxu0
        %v948 = vxor.u32 %v886, 2147483648
        %v949 = vxor.u32 %v889, 2147483648
        %v950 = vxor.u32 %v894, 2147483648
        %v951 = vxor.u32 %v897, 2147483648
        %v952 = vxor.u32 %v902, 2147483648
        %v953 = vxor.u32 %v905, 2147483648
        %v954 = vxor.u32 %v910, 2147483648
        %v955 = vxor.u32 %v913, 2147483648
        %v956 = vxor.u32 %v918, 2147483648
        %v957 = vxor.u32 %v921, 2147483648
        %v958 = vxor.u32 %v926, 2147483648
        %v959 = vxor.u32 %v929, 2147483648
        %v960 = vxor.u32 %v934, 2147483648
        %v961 = vxor.u32 %v937, 2147483648
        %v962 = vxor.u32 %v942, 2147483648
        %v963 = vxor.u32 %v945, 2147483648
        %v964 = vmul.f32 %v948, 1.442695
        %v965 = vpow.pop %v964
        %v966 = vmul.f32 %v949, 1.442695
        %v967 = vpow.pop %v966
        %v968 = vmul.f32 %v950, 1.442695
        %v969 = vpow.pop %v968
        %v970 = vmul.f32 %v951, 1.442695
        %v971 = vpow.pop %v970
        %v972 = vmul.f32 %v952, 1.442695
        %v973 = vpow.pop %v972
        %v974 = vmul.f32 %v953, 1.442695
        %v975 = vpow.pop %v974
        %v976 = vmul.f32 %v954, 1.442695
        %v977 = vpow.pop %v976
        %v978 = vmul.f32 %v955, 1.442695
        %v979 = vpow.pop %v978
        %v980 = vmul.f32 %v956, 1.442695
        %v981 = vpow.pop %v980
        %v982 = vmul.f32 %v957, 1.442695
        %v983 = vpow.pop %v982
        %v984 = vmul.f32 %v958, 1.442695
        %v985 = vpow.pop %v984
        %v986 = vmul.f32 %v959, 1.442695
        %v987 = vpow.pop %v986
        %v988 = vmul.f32 %v960, 1.442695
        %v989 = vpow.pop %v988
        %v990 = vmul.f32 %v961, 1.442695
        %v991 = vpow.pop %v990
        %v992 = vmul.f32 %v962, 1.442695
        %v993 = vpow.pop %v992
        %v994 = vmul.f32 %v963, 1.442695
        %v995 = vpow.pop %v994
        %v996 = vadd.f32 %v965, 1.0
        %v997 = vadd.f32 %v967, 1.0
        %v998 = vadd.f32 %v969, 1.0
        %v999 = vadd.f32 %v971, 1.0
        %v1000 = vadd.f32 %v973, 1.0
        %v1001 = vadd.f32 %v975, 1.0
        %v1002 = vadd.f32 %v977, 1.0
        %v1003 = vadd.f32 %v979, 1.0
        %v1004 = vadd.f32 %v981, 1.0
        %v1005 = vadd.f32 %v983, 1.0
        %v1006 = vadd.f32 %v985, 1.0
        %v1007 = vadd.f32 %v987, 1.0
        %v1008 = vadd.f32 %v989, 1.0
        %v1009 = vadd.f32 %v991, 1.0
        %v1010 = vadd.f32 %v993, 1.0
        %v1011 = vadd.f32 %v995, 1.0
        %v1012 = vrcp.pop %v996
        %v1013 = vmul.f32 1.0, %v1012
        %v1014 = vrcp.pop %v997
        %v1015 = vmul.f32 1.0, %v1014
        %v1016 = vrcp.pop %v998
        %v1017 = vmul.f32 1.0, %v1016
        %v1018 = vrcp.pop %v999
        %v1019 = vmul.f32 1.0, %v1018
        %v1020 = vrcp.pop %v1000
        %v1021 = vmul.f32 1.0, %v1020
        %v1022 = vrcp.pop %v1001
        %v1023 = vmul.f32 1.0, %v1022
        %v1024 = vrcp.pop %v1002
        %v1025 = vmul.f32 1.0, %v1024
        %v1026 = vrcp.pop %v1003
        %v1027 = vmul.f32 1.0, %v1026
        %v1028 = vrcp.pop %v1004
        %v1029 = vmul.f32 1.0, %v1028
        %v1030 = vrcp.pop %v1005
        %v1031 = vmul.f32 1.0, %v1030
        %v1032 = vrcp.pop %v1006
        %v1033 = vmul.f32 1.0, %v1032
        %v1034 = vrcp.pop %v1007
        %v1035 = vmul.f32 1.0, %v1034
        %v1036 = vrcp.pop %v1008
        %v1037 = vmul.f32 1.0, %v1036
        %v1038 = vrcp.pop %v1009
        %v1039 = vmul.f32 1.0, %v1038
        %v1040 = vrcp.pop %v1010
        %v1041 = vmul.f32 1.0, %v1040
        %v1042 = vrcp.pop %v1011
        %v1043 = vmul.f32 1.0, %v1042
        %1044 = vst [vmem:[%s293] sm:$0xff] %v1013
        %1045 = vst [vmem:[%s293 + $0x8] sm:$0xff] %v1015
        %1046 = vst [vmem:[%s293 + $0x10] sm:$0xff] %v1017
        %1047 = vst [vmem:[%s293 + $0x18] sm:$0xff] %v1019
        %1048 = vst [vmem:[%s293 + $0x20] sm:$0xff] %v1021
        %1049 = vst [vmem:[%s293 + $0x28] sm:$0xff] %v1023
        %1050 = vst [vmem:[%s293 + $0x30] sm:$0xff] %v1025
        %1051 = vst [vmem:[%s293 + $0x38] sm:$0xff] %v1027
        %1052 = vst [vmem:[%s293 + $0x40] sm:$0xff] %v1029
        %1053 = vst [vmem:[%s293 + $0x48] sm:$0xff] %v1031
        %1054 = vst [vmem:[%s293 + $0x50] sm:$0xff] %v1033
        %1055 = vst [vmem:[%s293 + $0x58] sm:$0xff] %v1035
        %1056 = vst [vmem:[%s293 + $0x60] sm:$0xff] %v1037
        %1057 = vst [vmem:[%s293 + $0x68] sm:$0xff] %v1039
        %1058 = vst [vmem:[%s293 + $0x70] sm:$0xff] %v1041
        %1059 = vst [vmem:[%s293 + $0x78] sm:$0xff] %v1043
        %s1060 = sand.u32 %s149, 1
        %s1061 = scalar_lea.sflag [#allocation3], %s1060
        %s1062 = sand.u32 %s149, 1
        %s1063 = smul.addr %s1062, 128
        %s1064 = scalar_lea.vmem [#allocation2], %s1063
        %s1065 = sand.u32 %s177, 1
        %s1066 = scalar_lea.sflag [#allocation5], %s1065
        %s1067 = sand.u32 %s177, 1
        %s1068 = smul.addr %s1067, 128
        %s1069 = scalar_lea.vmem [#allocation4], %s1068
        // Predicated region
        $region37: #{gaan_forward.3} parent=35 // pred_check
          %p1070 = pneg %p159
        $region38: #{gaan_forward.3} parent=35 // pred_check_branch
          %1072 = sbr.rel (%p1070) target = $region40
        $region39: #{gaan_forward.3} parent=35 // pred_region
          %s1073 = smul.u32 16, %s27
          %s1075 = ssub.s32 2048, 2048
          %1076 = vsyncadd %s1061, %s1075
          %s1077 = smul.addr %s1073, 2
          %s1078 = sadd.s32 %s28, %s1077
          %s1079 = smul.addr %s1078, 128
          %s1080 = scalar_lea.hbm %s4, %s1079
          %s1081 = sshll.u32 %s1064, 4
          %s1082 = int_to_ptr.vmem [resolvable:$true] %s1081
          %1087 = dma.vmem_to_hbm [thread:$0]  %s1082, 2048, %s1080, %s1061, 128, 256, 8
        $region40: #{gaan_forward.3} parent=35 // pred_fallthru
          _
        // Predicated region
        $region41: #{gaan_forward.3} parent=35 // pred_check
          %p1088 = pneg %p187
        $region42: #{gaan_forward.3} parent=35 // pred_check_branch
          %1090 = sbr.rel (%p1088) target = $region44
        $region43: #{gaan_forward.3} parent=35 // pred_region
          %s1091 = smul.u32 16, %s27
          %s1093 = ssub.s32 2048, 2048
          %1094 = vsyncadd %s1066, %s1093
          %s1095 = smul.addr %s1091, 2
          %s1096 = sadd.s32 %s28, %s1095
          %s1097 = smul.addr %s1096, 128
          %s1098 = scalar_lea.hbm %s5, %s1097
          %s1099 = sshll.u32 %s1069, 4
          %s1100 = int_to_ptr.vmem [resolvable:$true] %s1099
          %1105 = dma.vmem_to_hbm [thread:$0]  %s1100, 2048, %s1098, %s1066, 128, 256, 8
        $region44: #{gaan_forward.3} parent=35 // pred_fallthru
          _
      $region36: #{gaan_forward.3} parent=5 // pred_fallthru
        _
      %p1106 = scmp.le.s32.totalorder 2, %s18
      // Predicated region
      $region45: #{gaan_forward.3} parent=5 // pred_check
        %p1107 = pneg %p1106
      $region46: #{gaan_forward.3} parent=5 // pred_check_branch
        %1109 = sbr.rel (%p1107) target = $region48
      $region47: #{gaan_forward.3} parent=5 // pred_region
        %s1110 = ssub.s32 %s18, 2
        // Predicated region
        $region49: #{gaan_forward.3} parent=47 // pred_check
          %p1111 = pneg %p165
        $region50: #{gaan_forward.3} parent=47 // pred_check_branch
          %1113 = sbr.rel (%p1111) target = $region52
        $region51: #{gaan_forward.3} parent=47 // pred_region
          %s1114 = sand.u32 %s150, 1
          %s1115 = scalar_lea.sflag [#allocation3], %s1114
          %s1116 = sand.u32 %s150, 1
          %s1117 = smul.addr %s1116, 128
          %s1118 = scalar_lea.vmem [#allocation2], %s1117
          %1119 = dma.done %s1115, 2048
        $region52: #{gaan_forward.3} parent=47 // pred_fallthru
          _
        // Predicated region
        $region53: #{gaan_forward.3} parent=47 // pred_check
          %p1120 = pneg %p193
        $region54: #{gaan_forward.3} parent=47 // pred_check_branch
          %1122 = sbr.rel (%p1120) target = $region56
        $region55: #{gaan_forward.3} parent=47 // pred_region
          %s1123 = sand.u32 %s178, 1
          %s1124 = scalar_lea.sflag [#allocation5], %s1123
          %s1125 = sand.u32 %s178, 1
          %s1126 = smul.addr %s1125, 128
          %s1127 = scalar_lea.vmem [#allocation4], %s1126
          %1128 = dma.done %s1124, 2048
        $region56: #{gaan_forward.3} parent=47 // pred_fallthru
          _
      $region48: #{gaan_forward.3} parent=5 // pred_fallthru
        _
    $region6: #{gaan_forward.3} parent=1 // loop_footer
      %s22 = sadd.s32 1, %s18
    $region7: #{gaan_forward.3} parent=1 // loop_footer_branch
      %17 = sbr.rel target = $region3
    $region8: #{gaan_forward.3} parent=1 // loop_exit
      _
    %1129 = vsyncpa [#allocation3], 1
    %s1130 = scalar_lea.sflag [#allocation3], 1
    %1131 = vsyncpa %s1130, 1
    %1132 = vsyncpa [#allocation5], 1
    %s1133 = scalar_lea.sflag [#allocation5], 1
    %1134 = vsyncpa %s1133, 1

// kernel: gaan_forward.2
$region0: #{gaan_forward.2}
  #allocation0 [shape = 'u32[]', space=smem, size = 0x4, offset = 0x4, fixed_abs, tag = 'smem constant byte address 0x4 - core index']
  #allocation1 [shape = 'u32[144,128]{1,0:T(1,128)}', space=vmem, size = 0x12000, scoped, tag = 'internal scratch']
  %s0 = inlined_call_operand.vmem [shape: bf16[256,32], index: 0, kind: input, shape index: {}]
  %s1 = inlined_call_operand.vmem [shape: bf16[256,16], index: 1, kind: input, shape index: {}]
  %s2 = inlined_call_operand.vmem [shape: bf16[16,64], index: 2, kind: input, shape index: {}]
  %s3 = inlined_call_operand.vmem [shape: f32[1,64], index: 3, kind: input, shape index: {}]
  %s4 = inlined_call_operand.vmem [shape: bf16[64,32], index: 4, kind: input, shape index: {}]
  %s5 = inlined_call_operand.vmem [shape: f32[1,32], index: 5, kind: input, shape index: {}]
  %s6 = inlined_call_operand.vmem [shape: bf16[32,64], index: 6, kind: input, shape index: {}]
  %s7 = inlined_call_operand.vmem [shape: f32[1,64], index: 7, kind: input, shape index: {}]
  %s8 = inlined_call_operand.vmem [shape: bf16[64,64], index: 8, kind: input, shape index: {}]
  %s9 = inlined_call_operand.vmem [shape: f32[1,64], index: 9, kind: input, shape index: {}]
  %s10 = inlined_call_operand.vmem [shape: f32[256,32], index: 10, kind: output, shape index: {0}]
  %s11 = inlined_call_operand.vmem [shape: bf16[256,64], index: 11, kind: output, shape index: {1}]
  %s12 = inlined_call_operand.vmem [shape: bf16[256,64], index: 12, kind: output, shape index: {2}]
  %13 = xla_tuple %s10, %s11, %s12
  %s14 = sld [smem:[#allocation0]]
  $region89: #{gaan_forward.2} parent=0
    _
  %s16 = ssub.s32 1, %s14
  %s17 = scalar_select 0, %s16, %s14
  loop: start=0, step=1, limit=4
  $region2: #{gaan_forward.2} parent=0 // loop_pre_header
    _
  $region3: #{gaan_forward.2} parent=0 // loop_header
    %s19 = sphi 0, %s23
    %p20 = scmp.ge.s32.totalorder %s19, 4
    %s29 = sphi 0, %s31
    %s32 = sphi 0, %s29
    %s33 = sphi 0, %s32
    %s49 = sphi 0, %s33
    %s55 = sphi 0, %s57
    %s58 = sphi 0, %s55
    %s59 = sphi 0, %s58
    %s75 = sphi 0, %s59
    %s79 = sphi 0, %s79
    %s81 = sphi 0, %s79
    %s82 = sphi 0, %s81
    %s96 = sphi 0, %s82
    %s100 = sphi 0, %s100
    %s102 = sphi 0, %s100
    %s103 = sphi 0, %s102
    %s117 = sphi 0, %s103
    %s121 = sphi 0, %s121
    %s123 = sphi 0, %s121
    %s124 = sphi 0, %s123
    %s138 = sphi 0, %s124
    %s142 = sphi 0, %s142
    %s144 = sphi 0, %s142
    %s145 = sphi 0, %s144
    %s159 = sphi 0, %s145
    %s163 = sphi 0, %s163
    %s165 = sphi 0, %s163
    %s166 = sphi 0, %s165
    %s180 = sphi 0, %s166
    %s184 = sphi 0, %s184
    %s186 = sphi 0, %s184
    %s187 = sphi 0, %s186
    %s201 = sphi 0, %s187
    %s205 = sphi 0, %s205
    %s207 = sphi 0, %s205
    %s208 = sphi 0, %s207
    %s222 = sphi 0, %s208
    %s226 = sphi 0, %s226
    %s228 = sphi 0, %s226
    %s229 = sphi 0, %s228
    %s243 = sphi 0, %s229
    %s249 = sphi 0, %s251
    %s252 = sphi 0, %s249
    %s253 = sphi 0, %s252
    %s269 = sphi 0, %s253
    %s275 = sphi 0, %s277
    %s278 = sphi 0, %s275
    %s279 = sphi 0, %s278
    %s295 = sphi 0, %s279
    %s301 = sphi 0, %s303
    %s304 = sphi 0, %s301
    %s305 = sphi 0, %s304
    %s321 = sphi 0, %s305
  $region4: #{gaan_forward.2} parent=0 // loop_header_branch
    %22 = sbr.rel (%p20) target = $region8
  $region5: #{gaan_forward.2} parent=0 // loop_body
    %s24 = ssub.s32 %s19, 1
    %s25 = ssub.s32 %s19, 2
    %s26 = sadd.s32 %s19, 1
    %s27 = ssub.s32 %s19, %s26
    %p28 = scmp.eq.s32.totalorder %s27, 0
    %s30 = sadd.s32 %s29, 1
    %s31 = scalar_select %p28, %s29, %s30
    %p34 = pneg %p28
    %p35 = scmp.eq.s32.totalorder %s19, 1
    %p36 = por %p34, %p35
    %p37 = scmp.ne.s32.totalorder %s29, %s32
    %p38 = scmp.eq.s32.totalorder %s19, 0
    %p39 = por %p37, %p38
    %p40 = scmp.ne.s32.totalorder %s29, %s32
    %p41 = scmp.eq.s32.totalorder %s24, 1
    %p42 = por %p40, %p41
    %p43 = scmp.ne.s32.totalorder %s32, %s33
    %p44 = scmp.eq.s32.totalorder %s24, 0
    %p45 = por %p43, %p44
    %p46 = scmp.ne.s32.totalorder %s32, %s33
    %p47 = scmp.eq.s32.totalorder %s25, 1
    %p48 = por %p46, %p47
    %p50 = scmp.ne.s32.totalorder %s33, %s49
    %p51 = scmp.eq.s32.totalorder %s25, 0
    %p52 = por %p50, %p51
    %s53 = ssub.s32 %s19, %s26
    %p54 = scmp.eq.s32.totalorder %s53, 0
    %s56 = sadd.s32 %s55, 1
    %s57 = scalar_select %p54, %s55, %s56
    %p60 = pneg %p54
    %p61 = scmp.eq.s32.totalorder %s19, 1
    %p62 = por %p60, %p61
    %p63 = scmp.ne.s32.totalorder %s55, %s58
    %p64 = scmp.eq.s32.totalorder %s19, 0
    %p65 = por %p63, %p64
    %p66 = scmp.ne.s32.totalorder %s55, %s58
    %p67 = scmp.eq.s32.totalorder %s24, 1
    %p68 = por %p66, %p67
    %p69 = scmp.ne.s32.totalorder %s58, %s59
    %p70 = scmp.eq.s32.totalorder %s24, 0
    %p71 = por %p69, %p70
    %p72 = scmp.ne.s32.totalorder %s58, %s59
    %p73 = scmp.eq.s32.totalorder %s25, 1
    %p74 = por %p72, %p73
    %p76 = scmp.ne.s32.totalorder %s59, %s75
    %p77 = scmp.eq.s32.totalorder %s25, 0
    %p78 = por %p76, %p77
    %s80 = sadd.s32 %s79, 1
    %p83 = scmp.eq.s32.totalorder %s19, 1
    %p84 = scmp.ne.s32.totalorder %s79, %s81
    %p85 = scmp.eq.s32.totalorder %s19, 0
    %p86 = por %p84, %p85
    %p87 = scmp.ne.s32.totalorder %s79, %s81
    %p88 = scmp.eq.s32.totalorder %s24, 1
    %p89 = por %p87, %p88
    %p90 = scmp.ne.s32.totalorder %s81, %s82
    %p91 = scmp.eq.s32.totalorder %s24, 0
    %p92 = por %p90, %p91
    %p93 = scmp.ne.s32.totalorder %s81, %s82
    %p94 = scmp.eq.s32.totalorder %s25, 1
    %p95 = por %p93, %p94
    %p97 = scmp.ne.s32.totalorder %s82, %s96
    %p98 = scmp.eq.s32.totalorder %s25, 0
    %p99 = por %p97, %p98
    %s101 = sadd.s32 %s100, 1
    %p104 = scmp.eq.s32.totalorder %s19, 1
    %p105 = scmp.ne.s32.totalorder %s100, %s102
    %p106 = scmp.eq.s32.totalorder %s19, 0
    %p107 = por %p105, %p106
    %p108 = scmp.ne.s32.totalorder %s100, %s102
    %p109 = scmp.eq.s32.totalorder %s24, 1
    %p110 = por %p108, %p109
    %p111 = scmp.ne.s32.totalorder %s102, %s103
    %p112 = scmp.eq.s32.totalorder %s24, 0
    %p113 = por %p111, %p112
    %p114 = scmp.ne.s32.totalorder %s102, %s103
    %p115 = scmp.eq.s32.totalorder %s25, 1
    %p116 = por %p114, %p115
    %p118 = scmp.ne.s32.totalorder %s103, %s117
    %p119 = scmp.eq.s32.totalorder %s25, 0
    %p120 = por %p118, %p119
    %s122 = sadd.s32 %s121, 1
    %p125 = scmp.eq.s32.totalorder %s19, 1
    %p126 = scmp.ne.s32.totalorder %s121, %s123
    %p127 = scmp.eq.s32.totalorder %s19, 0
    %p128 = por %p126, %p127
    %p129 = scmp.ne.s32.totalorder %s121, %s123
    %p130 = scmp.eq.s32.totalorder %s24, 1
    %p131 = por %p129, %p130
    %p132 = scmp.ne.s32.totalorder %s123, %s124
    %p133 = scmp.eq.s32.totalorder %s24, 0
    %p134 = por %p132, %p133
    %p135 = scmp.ne.s32.totalorder %s123, %s124
    %p136 = scmp.eq.s32.totalorder %s25, 1
    %p137 = por %p135, %p136
    %p139 = scmp.ne.s32.totalorder %s124, %s138
    %p140 = scmp.eq.s32.totalorder %s25, 0
    %p141 = por %p139, %p140
    %s143 = sadd.s32 %s142, 1
    %p146 = scmp.eq.s32.totalorder %s19, 1
    %p147 = scmp.ne.s32.totalorder %s142, %s144
    %p148 = scmp.eq.s32.totalorder %s19, 0
    %p149 = por %p147, %p148
    %p150 = scmp.ne.s32.totalorder %s142, %s144
    %p151 = scmp.eq.s32.totalorder %s24, 1
    %p152 = por %p150, %p151
    %p153 = scmp.ne.s32.totalorder %s144, %s145
    %p154 = scmp.eq.s32.totalorder %s24, 0
    %p155 = por %p153, %p154
    %p156 = scmp.ne.s32.totalorder %s144, %s145
    %p157 = scmp.eq.s32.totalorder %s25, 1
    %p158 = por %p156, %p157
    %p160 = scmp.ne.s32.totalorder %s145, %s159
    %p161 = scmp.eq.s32.totalorder %s25, 0
    %p162 = por %p160, %p161
    %s164 = sadd.s32 %s163, 1
    %p167 = scmp.eq.s32.totalorder %s19, 1
    %p168 = scmp.ne.s32.totalorder %s163, %s165
    %p169 = scmp.eq.s32.totalorder %s19, 0
    %p170 = por %p168, %p169
    %p171 = scmp.ne.s32.totalorder %s163, %s165
    %p172 = scmp.eq.s32.totalorder %s24, 1
    %p173 = por %p171, %p172
    %p174 = scmp.ne.s32.totalorder %s165, %s166
    %p175 = scmp.eq.s32.totalorder %s24, 0
    %p176 = por %p174, %p175
    %p177 = scmp.ne.s32.totalorder %s165, %s166
    %p178 = scmp.eq.s32.totalorder %s25, 1
    %p179 = por %p177, %p178
    %p181 = scmp.ne.s32.totalorder %s166, %s180
    %p182 = scmp.eq.s32.totalorder %s25, 0
    %p183 = por %p181, %p182
    %s185 = sadd.s32 %s184, 1
    %p188 = scmp.eq.s32.totalorder %s19, 1
    %p189 = scmp.ne.s32.totalorder %s184, %s186
    %p190 = scmp.eq.s32.totalorder %s19, 0
    %p191 = por %p189, %p190
    %p192 = scmp.ne.s32.totalorder %s184, %s186
    %p193 = scmp.eq.s32.totalorder %s24, 1
    %p194 = por %p192, %p193
    %p195 = scmp.ne.s32.totalorder %s186, %s187
    %p196 = scmp.eq.s32.totalorder %s24, 0
    %p197 = por %p195, %p196
    %p198 = scmp.ne.s32.totalorder %s186, %s187
    %p199 = scmp.eq.s32.totalorder %s25, 1
    %p200 = por %p198, %p199
    %p202 = scmp.ne.s32.totalorder %s187, %s201
    %p203 = scmp.eq.s32.totalorder %s25, 0
    %p204 = por %p202, %p203
    %s206 = sadd.s32 %s205, 1
    %p209 = scmp.eq.s32.totalorder %s19, 1
    %p210 = scmp.ne.s32.totalorder %s205, %s207
    %p211 = scmp.eq.s32.totalorder %s19, 0
    %p212 = por %p210, %p211
    %p213 = scmp.ne.s32.totalorder %s205, %s207
    %p214 = scmp.eq.s32.totalorder %s24, 1
    %p215 = por %p213, %p214
    %p216 = scmp.ne.s32.totalorder %s207, %s208
    %p217 = scmp.eq.s32.totalorder %s24, 0
    %p218 = por %p216, %p217
    %p219 = scmp.ne.s32.totalorder %s207, %s208
    %p220 = scmp.eq.s32.totalorder %s25, 1
    %p221 = por %p219, %p220
    %p223 = scmp.ne.s32.totalorder %s208, %s222
    %p224 = scmp.eq.s32.totalorder %s25, 0
    %p225 = por %p223, %p224
    %s227 = sadd.s32 %s226, 1
    %p230 = scmp.eq.s32.totalorder %s19, 1
    %p231 = scmp.ne.s32.totalorder %s226, %s228
    %p232 = scmp.eq.s32.totalorder %s19, 0
    %p233 = por %p231, %p232
    %p234 = scmp.ne.s32.totalorder %s226, %s228
    %p235 = scmp.eq.s32.totalorder %s24, 1
    %p236 = por %p234, %p235
    %p237 = scmp.ne.s32.totalorder %s228, %s229
    %p238 = scmp.eq.s32.totalorder %s24, 0
    %p239 = por %p237, %p238
    %p240 = scmp.ne.s32.totalorder %s228, %s229
    %p241 = scmp.eq.s32.totalorder %s25, 1
    %p242 = por %p240, %p241
    %p244 = scmp.ne.s32.totalorder %s229, %s243
    %p245 = scmp.eq.s32.totalorder %s25, 0
    %p246 = por %p244, %p245
    %s247 = ssub.s32 %s19, %s26
    %p248 = scmp.eq.s32.totalorder %s247, 0
    %s250 = sadd.s32 %s249, 1
    %s251 = scalar_select %p248, %s249, %s250
    %p254 = pneg %p248
    %p255 = scmp.eq.s32.totalorder %s19, 1
    %p256 = por %p254, %p255
    %p257 = scmp.ne.s32.totalorder %s249, %s252
    %p258 = scmp.eq.s32.totalorder %s19, 0
    %p259 = por %p257, %p258
    %p260 = scmp.ne.s32.totalorder %s249, %s252
    %p261 = scmp.eq.s32.totalorder %s24, 1
    %p262 = por %p260, %p261
    %p263 = scmp.ne.s32.totalorder %s252, %s253
    %p264 = scmp.eq.s32.totalorder %s24, 0
    %p265 = por %p263, %p264
    %p266 = scmp.ne.s32.totalorder %s252, %s253
    %p267 = scmp.eq.s32.totalorder %s25, 1
    %p268 = por %p266, %p267
    %p270 = scmp.ne.s32.totalorder %s253, %s269
    %p271 = scmp.eq.s32.totalorder %s25, 0
    %p272 = por %p270, %p271
    %s273 = ssub.s32 %s19, %s26
    %p274 = scmp.eq.s32.totalorder %s273, 0
    %s276 = sadd.s32 %s275, 1
    %s277 = scalar_select %p274, %s275, %s276
    %p280 = pneg %p274
    %p281 = scmp.eq.s32.totalorder %s19, 1
    %p282 = por %p280, %p281
    %p283 = scmp.ne.s32.totalorder %s275, %s278
    %p284 = scmp.eq.s32.totalorder %s19, 0
    %p285 = por %p283, %p284
    %p286 = scmp.ne.s32.totalorder %s275, %s278
    %p287 = scmp.eq.s32.totalorder %s24, 1
    %p288 = por %p286, %p287
    %p289 = scmp.ne.s32.totalorder %s278, %s279
    %p290 = scmp.eq.s32.totalorder %s24, 0
    %p291 = por %p289, %p290
    %p292 = scmp.ne.s32.totalorder %s278, %s279
    %p293 = scmp.eq.s32.totalorder %s25, 1
    %p294 = por %p292, %p293
    %p296 = scmp.ne.s32.totalorder %s279, %s295
    %p297 = scmp.eq.s32.totalorder %s25, 0
    %p298 = por %p296, %p297
    %s299 = ssub.s32 %s19, %s26
    %p300 = scmp.eq.s32.totalorder %s299, 0
    %s302 = sadd.s32 %s301, 1
    %s303 = scalar_select %p300, %s301, %s302
    %p306 = pneg %p300
    %p307 = scmp.eq.s32.totalorder %s19, 1
    %p308 = por %p306, %p307
    %p309 = scmp.ne.s32.totalorder %s301, %s304
    %p310 = scmp.eq.s32.totalorder %s19, 0
    %p311 = por %p309, %p310
    %p312 = scmp.ne.s32.totalorder %s301, %s304
    %p313 = scmp.eq.s32.totalorder %s24, 1
    %p314 = por %p312, %p313
    %p315 = scmp.ne.s32.totalorder %s304, %s305
    %p316 = scmp.eq.s32.totalorder %s24, 0
    %p317 = por %p315, %p316
    %p318 = scmp.ne.s32.totalorder %s304, %s305
    %p319 = scmp.eq.s32.totalorder %s25, 1
    %p320 = por %p318, %p319
    %p322 = scmp.ne.s32.totalorder %s305, %s321
    %p323 = scmp.eq.s32.totalorder %s25, 0
    %p324 = por %p322, %p323
    %p325 = scmp.le.s32.totalorder 1, %s19
    %p326 = scmp.lt.s32.totalorder %s19, 3
    %p327 = pnand %p325, %p326
    %p328 = pneg %p327
    // Predicated region
    $region9: #{gaan_forward.2} parent=5 // pred_check
      _
    $region10: #{gaan_forward.2} parent=5 // pred_check_branch
      %330 = sbr.rel (%p327) target = $region12
    $region11: #{gaan_forward.2} parent=5 // pred_region
      %s331 = ssub.s32 %s19, 1
      // Predicated region
      $region13: #{gaan_forward.2} parent=11 // pred_check
        %p332 = pneg %p92
      $region14: #{gaan_forward.2} parent=11 // pred_check_branch
        %334 = sbr.rel (%p332) target = $region16
      $region15: #{gaan_forward.2} parent=11 // pred_region
        _
      $region16: #{gaan_forward.2} parent=11 // pred_fallthru
        _
      // Predicated region
      $region17: #{gaan_forward.2} parent=11 // pred_check
        %p335 = pneg %p113
      $region18: #{gaan_forward.2} parent=11 // pred_check_branch
        %337 = sbr.rel (%p335) target = $region20
      $region19: #{gaan_forward.2} parent=11 // pred_region
        _
      $region20: #{gaan_forward.2} parent=11 // pred_fallthru
        _
      // Predicated region
      $region21: #{gaan_forward.2} parent=11 // pred_check
        %p338 = pneg %p134
      $region22: #{gaan_forward.2} parent=11 // pred_check_branch
        %340 = sbr.rel (%p338) target = $region24
      $region23: #{gaan_forward.2} parent=11 // pred_region
        _
      $region24: #{gaan_forward.2} parent=11 // pred_fallthru
        _
      // Predicated region
      $region25: #{gaan_forward.2} parent=11 // pred_check
        %p341 = pneg %p155
      $region26: #{gaan_forward.2} parent=11 // pred_check_branch
        %343 = sbr.rel (%p341) target = $region28
      $region27: #{gaan_forward.2} parent=11 // pred_region
        _
      $region28: #{gaan_forward.2} parent=11 // pred_fallthru
        _
      // Predicated region
      $region29: #{gaan_forward.2} parent=11 // pred_check
        %p344 = pneg %p176
      $region30: #{gaan_forward.2} parent=11 // pred_check_branch
        %346 = sbr.rel (%p344) target = $region32
      $region31: #{gaan_forward.2} parent=11 // pred_region
        _
      $region32: #{gaan_forward.2} parent=11 // pred_fallthru
        _
      // Predicated region
      $region33: #{gaan_forward.2} parent=11 // pred_check
        %p347 = pneg %p197
      $region34: #{gaan_forward.2} parent=11 // pred_check_branch
        %349 = sbr.rel (%p347) target = $region36
      $region35: #{gaan_forward.2} parent=11 // pred_region
        _
      $region36: #{gaan_forward.2} parent=11 // pred_fallthru
        _
      // Predicated region
      $region37: #{gaan_forward.2} parent=11 // pred_check
        %p350 = pneg %p218
      $region38: #{gaan_forward.2} parent=11 // pred_check_branch
        %352 = sbr.rel (%p350) target = $region40
      $region39: #{gaan_forward.2} parent=11 // pred_region
        _
      $region40: #{gaan_forward.2} parent=11 // pred_fallthru
        _
      // Predicated region
      $region41: #{gaan_forward.2} parent=11 // pred_check
        %p353 = pneg %p239
      $region42: #{gaan_forward.2} parent=11 // pred_check_branch
        %355 = sbr.rel (%p353) target = $region44
      $region43: #{gaan_forward.2} parent=11 // pred_region
        _
      $region44: #{gaan_forward.2} parent=11 // pred_fallthru
        _
    $region12: #{gaan_forward.2} parent=5 // pred_fallthru
      _
    %p356 = scmp.lt.s32.totalorder %s19, 2
    // Predicated region
    $region45: #{gaan_forward.2} parent=5 // pred_check
      %p357 = pneg %p356
    $region46: #{gaan_forward.2} parent=5 // pred_check_branch
      %359 = sbr.rel (%p357) target = $region48
    $region47: #{gaan_forward.2} parent=5 // pred_region
      // Predicated region
      $region49: #{gaan_forward.2} parent=47 // pred_check
        %p360 = pneg %p39
      $region50: #{gaan_forward.2} parent=47 // pred_check_branch
        %362 = sbr.rel (%p360) target = $region52
      $region51: #{gaan_forward.2} parent=47 // pred_region
        %s363 = smul.u32 16, %s19
        %p364 = scmp.lt.s32.totalorder %s363, 31
        %s365 = scalar_select %p364, %s363, 31
        %s366 = smul.addr %s365, 4
        %s367 = scalar_lea.vmem %s0, %s366
        %s368 = smul.u32 16, %s19
      $region52: #{gaan_forward.2} parent=47 // pred_fallthru
        _
      // Predicated region
      $region53: #{gaan_forward.2} parent=47 // pred_check
        %p369 = pneg %p65
      $region54: #{gaan_forward.2} parent=47 // pred_check_branch
        %371 = sbr.rel (%p369) target = $region56
      $region55: #{gaan_forward.2} parent=47 // pred_region
        %s372 = smul.u32 16, %s19
        %p373 = scmp.lt.s32.totalorder %s372, 31
        %s374 = scalar_select %p373, %s372, 31
        %s375 = smul.addr %s374, 4
        %s376 = scalar_lea.vmem %s1, %s375
        %s377 = smul.u32 16, %s19
      $region56: #{gaan_forward.2} parent=47 // pred_fallthru
        _
    $region48: #{gaan_forward.2} parent=5 // pred_fallthru
      _
    %p378 = scmp.le.s32.totalorder 1, %s19
    %p379 = scmp.lt.s32.totalorder %s19, 3
    %p380 = pnand %p378, %p379
    %p381 = pneg %p380
    // Predicated region
    $region57: #{gaan_forward.2} parent=5 // pred_check
      _
    $region58: #{gaan_forward.2} parent=5 // pred_check_branch
      %383 = sbr.rel (%p380) target = $region60
    $region59: #{gaan_forward.2} parent=5 // pred_region
      %s384 = ssub.s32 %s19, 1
      %s385 = smul.u32 16, %s24
      %p386 = scmp.lt.s32.totalorder %s385, 31
      %s387 = scalar_select %p386, %s385, 31
      %s388 = smul.addr %s387, 4
      %s389 = scalar_lea.vmem %s0, %s388
      %p390 = pneg %p45
      %p391 = pneg %p42
      %s392 = smul.u32 16, %s24
      %p393 = scmp.lt.s32.totalorder %s392, 31
      %s394 = scalar_select %p393, %s392, 31
      %s395 = smul.addr %s394, 4
      %s396 = scalar_lea.vmem %s1, %s395
      %p397 = pneg %p71
      %p398 = pneg %p68
      %p399 = pneg %p92
      %p400 = pneg %p89
      %p401 = pneg %p113
      %p402 = pneg %p110
      %p403 = pneg %p134
      %p404 = pneg %p131
      %p405 = pneg %p155
      %p406 = pneg %p152
      %p407 = pneg %p176
      %p408 = pneg %p173
      %p409 = pneg %p197
      %p410 = pneg %p194
      %p411 = pneg %p218
      %p412 = pneg %p215
      %p413 = pneg %p239
      %p414 = pneg %p236
      %p415 = pneg %p265
      %p416 = pneg %p262
      %s417 = smul.u32 16, %s24
      %p418 = scmp.lt.s32.totalorder %s417, 31
      %s419 = scalar_select %p418, %s417, 31
      %s420 = smul.addr %s419, 8
      %s421 = scalar_lea.vmem %s10, %s420
      %p422 = pneg %p291
      %p423 = pneg %p288
      %s424 = smul.u32 16, %s24
      %p425 = scmp.lt.s32.totalorder %s424, 31
      %s426 = scalar_select %p425, %s424, 31
      %s427 = smul.addr %s426, 4
      %s428 = scalar_lea.vmem %s11, %s427
      %p429 = pneg %p317
      %p430 = pneg %p314
      %s431 = smul.u32 16, %s24
      %p432 = scmp.lt.s32.totalorder %s431, 31
      %s433 = scalar_select %p432, %s431, 31
      %s434 = smul.addr %s433, 4
      %s435 = scalar_lea.vmem %s12, %s434
      %s436 = smul.u32 16, %s24
      %p437 = scmp.lt.s32.totalorder %s436, 31
      %s438 = scalar_select %p437, %s436, 31
      %s439 = smul.addr %s438, 4
      %s440 = scalar_lea.vmem %s0, %s439
      %s441 = smul.u32 16, %s24
      %s442 = smul.u32 16, %s24
      %p443 = scmp.lt.s32.totalorder %s442, 31
      %s444 = scalar_select %p443, %s442, 31
      %s445 = smul.addr %s444, 4
      %s446 = scalar_lea.vmem %s1, %s445
      %s447 = smul.u32 16, %s24
      %s448 = smul.u32 16, %s24
      %p449 = scmp.lt.s32.totalorder %s448, 31
      %s450 = scalar_select %p449, %s448, 31
      %s451 = smul.addr %s450, 8
      %s452 = scalar_lea.vmem %s10, %s451
      %s453 = smul.u32 16, %s24
      %s454 = smul.u32 16, %s24
      %p455 = scmp.lt.s32.totalorder %s454, 31
      %s456 = scalar_select %p455, %s454, 31
      %s457 = smul.addr %s456, 4
      %s458 = scalar_lea.vmem %s11, %s457
      %s459 = smul.u32 16, %s24
      %s460 = smul.u32 16, %s24
      %p461 = scmp.lt.s32.totalorder %s460, 31
      %s462 = scalar_select %p461, %s460, 31
      %s463 = smul.addr %s462, 4
      %s464 = scalar_lea.vmem %s12, %s463
      %s465 = smul.u32 16, %s24
      %v467 = vld [vmem:[%s446] sm:$0xf]
      %v468 = vld [vmem:[%s446 + $0x4] sm:$0xf]
      %v469 = vld [vmem:[%s446 + $0x8] sm:$0xf]
      %v470 = vld [vmem:[%s446 + $0xc] sm:$0xf]
      %v471 = vld [vmem:[%s446 + $0x10] sm:$0xf]
      %v472 = vld [vmem:[%s446 + $0x14] sm:$0xf]
      %v473 = vld [vmem:[%s446 + $0x18] sm:$0xf]
      %v474 = vld [vmem:[%s446 + $0x1c] sm:$0xf]
      %v475 = vld [vmem:[%s446 + $0x20] sm:$0xf]
      %v476 = vld [vmem:[%s446 + $0x24] sm:$0xf]
      %v477 = vld [vmem:[%s446 + $0x28] sm:$0xf]
      %v478 = vld [vmem:[%s446 + $0x2c] sm:$0xf]
      %v479 = vld [vmem:[%s446 + $0x30] sm:$0xf]
      %v480 = vld [vmem:[%s446 + $0x34] sm:$0xf]
      %v481 = vld [vmem:[%s446 + $0x38] sm:$0xf]
      %v482 = vld [vmem:[%s446 + $0x3c] sm:$0xf]
      %v483 = vld [vmem:[%s2] sm:$0xf]
      %v484 = vld [vmem:[%s2 + $0x4] sm:$0xf]
      %v485 = vld [vmem:[%s3] sm:$0x1]
      %v487 = vlaneseq
      %v488 = vshrl.u32 %v487, 7
      %v489 = vsub.s32 0, %v488
      %v490 = vrot.slane %v485, %v489
      %v508 = vunpack.c.l.b16 %v467
      %v509 = vunpack.c.l.b16 %v468
      %v510 = vunpack.c.l.b16 %v469
      %v511 = vunpack.c.l.b16 %v470
      %v512 = vunpack.c.l.b16 %v471
      %v513 = vunpack.c.l.b16 %v472
      %v514 = vunpack.c.l.b16 %v473
      %v515 = vunpack.c.l.b16 %v474
      %v516 = vunpack.c.l.b16 %v475
      %v517 = vunpack.c.l.b16 %v476
      %v518 = vunpack.c.l.b16 %v477
      %v519 = vunpack.c.l.b16 %v478
      %v520 = vunpack.c.l.b16 %v479
      %v521 = vunpack.c.l.b16 %v480
      %v522 = vunpack.c.l.b16 %v481
      %v523 = vunpack.c.l.b16 %v482
      %v524 = vpack.c.b16 %v509, %v508
      %v525 = vpack.c.b16 %v511, %v510
      %v526 = vpack.c.b16 %v513, %v512
      %v527 = vpack.c.b16 %v515, %v514
      %v528 = vpack.c.b16 %v517, %v516
      %v529 = vpack.c.b16 %v519, %v518
      %v530 = vpack.c.b16 %v521, %v520
      %v531 = vpack.c.b16 %v523, %v522
      %v534 = vunpack.c.l.b16 %v483
      %v535 = vunpack.c.l.b16 %v484
      %v536 = vpack.c.b16 %v535, %v534
      %vm538 = vcmask 130048
      %v540 = vsel %vm538, %v524, 0
      %v543 = vsel %vm538, %v525, 0
      %v546 = vsel %vm538, %v526, 0
      %v549 = vsel %vm538, %v527, 0
      %v552 = vsel %vm538, %v528, 0
      %v555 = vsel %vm538, %v529, 0
      %v558 = vsel %vm538, %v530, 0
      %v561 = vsel %vm538, %v531, 0
      %563 = vmatprep.subr.bf16.mxu0 0
      %564 = vmatpush1.bf16.msra.mxu0 0
      %565 = vmatprep.subr.bf16.mxu0 0
      %566 = vmatpush1.bf16.msra.mxu0 0
      %567 = vmatprep.subr.bf16.mxu0 0
      %568 = vmatpush1.bf16.msra.mxu0 0
      %569 = vmatprep.subr.bf16.mxu0 0
      %570 = vmatpush1.bf16.msra.mxu0 0
      %571 = vmatprep.subr.bf16.mxu0 0
      %572 = vmatpush1.bf16.msra.mxu0 0
      %573 = vmatprep.subr.bf16.mxu0 0
      %574 = vmatpush1.bf16.msra.mxu0 0
      %575 = vmatprep.subr.bf16.mxu0 0
      %576 = vmatpush1.bf16.msra.mxu0 0
      %577 = vmatprep.subr.bf16.mxu0 0
      %578 = vmatpush1.bf16.msra.mxu0 %v536
      %579 = vmatprep.subr.bf16.mxu0 0
      %580 = vmatpush2.bf16.msra.mxu0 0
      %581 = vmatprep.subr.bf16.mxu0 0
      %582 = vmatpush2.bf16.msra.mxu0 0
      %583 = vmatprep.subr.bf16.mxu0 0
      %584 = vmatpush2.bf16.msra.mxu0 0
      %585 = vmatprep.subr.bf16.mxu0 0
      %586 = vmatpush2.bf16.msra.mxu0 0
      %587 = vmatprep.subr.bf16.mxu0 0
      %588 = vmatpush2.bf16.msra.mxu0 0
      %589 = vmatprep.subr.bf16.mxu0 0
      %590 = vmatpush2.bf16.msra.mxu0 0
      %591 = vmatprep.subr.bf16.mxu0 0
      %592 = vmatpush2.bf16.msra.mxu0 0
      %593 = vmatprep.subr.bf16.mxu0 0
      %594 = vmatpush2.bf16.msra.mxu0 0
      %595 = vmatprep.mubr.bf16.mxu0 0
      %596 = vmatmul.mubr.bf16.gmra.mxu0 %v540
      %v597 = vpop.f32.mrf.mxu0
      %v598 = vadd.f32 %v490, %v597
      %v599 = vpop.f32.mrf.mxu0
      %v600 = vpop.f32.mrf.mxu0
      %v601 = vadd.f32 %v490, %v600
      %v602 = vpop.f32.mrf.mxu0
      %603 = vmatprep.mubr.bf16.mxu0 0
      %604 = vmatmul.mubr.bf16.gmra.mxu0 %v543
      %v605 = vpop.f32.mrf.mxu0
      %v606 = vadd.f32 %v490, %v605
      %v607 = vpop.f32.mrf.mxu0
      %v608 = vpop.f32.mrf.mxu0
      %v609 = vadd.f32 %v490, %v608
      %v610 = vpop.f32.mrf.mxu0
      %611 = vmatprep.mubr.bf16.mxu0 0
      %612 = vmatmul.mubr.bf16.gmra.mxu0 %v546
      %v613 = vpop.f32.mrf.mxu0
      %v614 = vadd.f32 %v490, %v613
      %v615 = vpop.f32.mrf.mxu0
      %v616 = vpop.f32.mrf.mxu0
      %v617 = vadd.f32 %v490, %v616
      %v618 = vpop.f32.mrf.mxu0
      %619 = vmatprep.mubr.bf16.mxu0 0
      %620 = vmatmul.mubr.bf16.gmra.mxu0 %v549
      %v621 = vpop.f32.mrf.mxu0
      %v622 = vadd.f32 %v490, %v621
      %v623 = vpop.f32.mrf.mxu0
      %v624 = vpop.f32.mrf.mxu0
      %v625 = vadd.f32 %v490, %v624
      %v626 = vpop.f32.mrf.mxu0
      %627 = vmatprep.mubr.bf16.mxu0 0
      %628 = vmatmul.mubr.bf16.gmra.mxu0 %v552
      %v629 = vpop.f32.mrf.mxu0
      %v630 = vadd.f32 %v490, %v629
      %v631 = vpop.f32.mrf.mxu0
      %v632 = vpop.f32.mrf.mxu0
      %v633 = vadd.f32 %v490, %v632
      %v634 = vpop.f32.mrf.mxu0
      %635 = vmatprep.mubr.bf16.mxu0 0
      %636 = vmatmul.mubr.bf16.gmra.mxu0 %v555
      %v637 = vpop.f32.mrf.mxu0
      %v638 = vadd.f32 %v490, %v637
      %v639 = vpop.f32.mrf.mxu0
      %v640 = vpop.f32.mrf.mxu0
      %v641 = vadd.f32 %v490, %v640
      %v642 = vpop.f32.mrf.mxu0
      %643 = vmatprep.mubr.bf16.mxu0 0
      %644 = vmatmul.mubr.bf16.gmra.mxu0 %v558
      %v645 = vpop.f32.mrf.mxu0
      %v646 = vadd.f32 %v490, %v645
      %v647 = vpop.f32.mrf.mxu0
      %v648 = vpop.f32.mrf.mxu0
      %v649 = vadd.f32 %v490, %v648
      %v650 = vpop.f32.mrf.mxu0
      %651 = vmatprep.mubr.bf16.mxu0 0
      %652 = vmatmul.mubr.bf16.gmra.mxu0 %v561
      %v653 = vpop.f32.mrf.mxu0
      %v654 = vadd.f32 %v490, %v653
      %v655 = vpop.f32.mrf.mxu0
      %v656 = vpop.f32.mrf.mxu0
      %v657 = vadd.f32 %v490, %v656
      %v658 = vpop.f32.mrf.mxu0
      %659 = vdwg.mxu0
      %v660 = vmax.f32 %v598, 0.0
      %v661 = vmax.f32 %v601, 0.0
      %v662 = vmax.f32 %v606, 0.0
      %v663 = vmax.f32 %v609, 0.0
      %v664 = vmax.f32 %v614, 0.0
      %v665 = vmax.f32 %v617, 0.0
      %v666 = vmax.f32 %v622, 0.0
      %v667 = vmax.f32 %v625, 0.0
      %v668 = vmax.f32 %v630, 0.0
      %v669 = vmax.f32 %v633, 0.0
      %v670 = vmax.f32 %v638, 0.0
      %v671 = vmax.f32 %v641, 0.0
      %v672 = vmax.f32 %v646, 0.0
      %v673 = vmax.f32 %v649, 0.0
      %v674 = vmax.f32 %v654, 0.0
      %v675 = vmax.f32 %v657, 0.0
      %v676 = vpack.c.bf16 %v661, %v660
      %v677 = vpack.c.bf16 %v663, %v662
      %v678 = vpack.c.bf16 %v665, %v664
      %v679 = vpack.c.bf16 %v667, %v666
      %v680 = vpack.c.bf16 %v669, %v668
      %v681 = vpack.c.bf16 %v671, %v670
      %v682 = vpack.c.bf16 %v673, %v672
      %v683 = vpack.c.bf16 %v675, %v674
      %v684 = vld [vmem:[%s4] sm:$0xf]
      %v685 = vld [vmem:[%s4 + $0x4] sm:$0xf]
      %v686 = vld [vmem:[%s4 + $0x8] sm:$0xf]
      %v687 = vld [vmem:[%s4 + $0xc] sm:$0xf]
      %v688 = vld [vmem:[%s4 + $0x10] sm:$0xf]
      %v689 = vld [vmem:[%s4 + $0x14] sm:$0xf]
      %v690 = vld [vmem:[%s4 + $0x18] sm:$0xf]
      %v691 = vld [vmem:[%s4 + $0x1c] sm:$0xf]
      %v692 = vld [vmem:[%s5] sm:$0x1]
      %v694 = vlaneseq
      %v695 = vshrl.u32 %v694, 7
      %v696 = vsub.s32 0, %v695
      %v697 = vrot.slane %v692, %v696
      %v707 = vunpack.c.l.b16 %v684
      %v708 = vunpack.c.l.b16 %v685
      %v709 = vunpack.c.l.b16 %v686
      %v710 = vunpack.c.l.b16 %v687
      %v711 = vunpack.c.l.b16 %v688
      %v712 = vunpack.c.l.b16 %v689
      %v713 = vunpack.c.l.b16 %v690
      %v714 = vunpack.c.l.b16 %v691
      %v715 = vpack.c.b16 %v708, %v707
      %v716 = vpack.c.b16 %v710, %v709
      %v717 = vpack.c.b16 %v712, %v711
      %v718 = vpack.c.b16 %v714, %v713
      %vm723 = vcmask 523264
      %v725 = vsel %vm723, %v676, 0
      %v728 = vsel %vm723, %v677, 0
      %v731 = vsel %vm723, %v678, 0
      %v734 = vsel %vm723, %v679, 0
      %v737 = vsel %vm723, %v680, 0
      %v740 = vsel %vm723, %v681, 0
      %v743 = vsel %vm723, %v682, 0
      %v746 = vsel %vm723, %v683, 0
      %748 = vmatprep.subr.bf16.mxu0 0
      %749 = vmatpush1.bf16.msra.mxu0 0
      %750 = vmatprep.subr.bf16.mxu0 0
      %751 = vmatpush1.bf16.msra.mxu0 0
      %752 = vmatprep.subr.bf16.mxu0 0
      %753 = vmatpush1.bf16.msra.mxu0 0
      %754 = vmatprep.subr.bf16.mxu0 0
      %755 = vmatpush1.bf16.msra.mxu0 0
      %756 = vmatprep.subr.bf16.mxu0 0
      %757 = vmatpush1.bf16.msra.mxu0 %v718
      %758 = vmatprep.subr.bf16.mxu0 0
      %759 = vmatpush1.bf16.msra.mxu0 %v717
      %760 = vmatprep.subr.bf16.mxu0 0
      %761 = vmatpush1.bf16.msra.mxu0 %v716
      %762 = vmatprep.subr.bf16.mxu0 0
      %763 = vmatpush1.bf16.msra.mxu0 %v715
      %764 = vmatprep.subr.bf16.mxu0 0
      %765 = vmatpush2.bf16.msra.mxu0 0
      %766 = vmatprep.subr.bf16.mxu0 0
      %767 = vmatpush2.bf16.msra.mxu0 0
      %768 = vmatprep.subr.bf16.mxu0 0
      %769 = vmatpush2.bf16.msra.mxu0 0
      %770 = vmatprep.subr.bf16.mxu0 0
      %771 = vmatpush2.bf16.msra.mxu0 0
      %772 = vmatprep.subr.bf16.mxu0 0
      %773 = vmatpush2.bf16.msra.mxu0 0
      %774 = vmatprep.subr.bf16.mxu0 0
      %775 = vmatpush2.bf16.msra.mxu0 0
      %776 = vmatprep.subr.bf16.mxu0 0
      %777 = vmatpush2.bf16.msra.mxu0 0
      %778 = vmatprep.subr.bf16.mxu0 0
      %779 = vmatpush2.bf16.msra.mxu0 0
      %780 = vmatprep.mubr.bf16.mxu0 0
      %781 = vmatmul.mubr.bf16.gmra.mxu0 %v725
      %v782 = vpop.f32.mrf.mxu0
      %v783 = vadd.f32 %v697, %v782
      %v784 = vpop.f32.mrf.mxu0
      %v785 = vpop.f32.mrf.mxu0
      %v786 = vadd.f32 %v697, %v785
      %v787 = vpop.f32.mrf.mxu0
      %788 = vmatprep.mubr.bf16.mxu0 0
      %789 = vmatmul.mubr.bf16.gmra.mxu0 %v728
      %v790 = vpop.f32.mrf.mxu0
      %v791 = vadd.f32 %v697, %v790
      %v792 = vpop.f32.mrf.mxu0
      %v793 = vpop.f32.mrf.mxu0
      %v794 = vadd.f32 %v697, %v793
      %v795 = vpop.f32.mrf.mxu0
      %796 = vmatprep.mubr.bf16.mxu0 0
      %797 = vmatmul.mubr.bf16.gmra.mxu0 %v731
      %v798 = vpop.f32.mrf.mxu0
      %v799 = vadd.f32 %v697, %v798
      %v800 = vpop.f32.mrf.mxu0
      %v801 = vpop.f32.mrf.mxu0
      %v802 = vadd.f32 %v697, %v801
      %v803 = vpop.f32.mrf.mxu0
      %804 = vmatprep.mubr.bf16.mxu0 0
      %805 = vmatmul.mubr.bf16.gmra.mxu0 %v734
      %v806 = vpop.f32.mrf.mxu0
      %v807 = vadd.f32 %v697, %v806
      %v808 = vpop.f32.mrf.mxu0
      %v809 = vpop.f32.mrf.mxu0
      %v810 = vadd.f32 %v697, %v809
      %v811 = vpop.f32.mrf.mxu0
      %812 = vmatprep.mubr.bf16.mxu0 0
      %813 = vmatmul.mubr.bf16.gmra.mxu0 %v737
      %v814 = vpop.f32.mrf.mxu0
      %v815 = vadd.f32 %v697, %v814
      %v816 = vpop.f32.mrf.mxu0
      %v817 = vpop.f32.mrf.mxu0
      %v818 = vadd.f32 %v697, %v817
      %v819 = vpop.f32.mrf.mxu0
      %820 = vmatprep.mubr.bf16.mxu0 0
      %821 = vmatmul.mubr.bf16.gmra.mxu0 %v740
      %v822 = vpop.f32.mrf.mxu0
      %v823 = vadd.f32 %v697, %v822
      %v824 = vpop.f32.mrf.mxu0
      %v825 = vpop.f32.mrf.mxu0
      %v826 = vadd.f32 %v697, %v825
      %v827 = vpop.f32.mrf.mxu0
      %828 = vmatprep.mubr.bf16.mxu0 0
      %829 = vmatmul.mubr.bf16.gmra.mxu0 %v743
      %v830 = vpop.f32.mrf.mxu0
      %v831 = vadd.f32 %v697, %v830
      %v832 = vpop.f32.mrf.mxu0
      %v833 = vpop.f32.mrf.mxu0
      %v834 = vadd.f32 %v697, %v833
      %v835 = vpop.f32.mrf.mxu0
      %836 = vmatprep.mubr.bf16.mxu0 0
      %837 = vmatmul.mubr.bf16.gmra.mxu0 %v746
      %v838 = vpop.f32.mrf.mxu0
      %v839 = vadd.f32 %v697, %v838
      %v840 = vpop.f32.mrf.mxu0
      %v841 = vpop.f32.mrf.mxu0
      %v842 = vadd.f32 %v697, %v841
      %v843 = vpop.f32.mrf.mxu0
      %844 = vdwg.mxu0
      %vm845 = vcmask 261120
      %846 = vst.msk [vmem:[%s452] sm:$0xff] %vm845, %v783
      %847 = vst.msk [vmem:[%s452 + $0x8] sm:$0xff] %vm845, %v786
      %848 = vst.msk [vmem:[%s452 + $0x10] sm:$0xff] %vm845, %v791
      %849 = vst.msk [vmem:[%s452 + $0x18] sm:$0xff] %vm845, %v794
      %850 = vst.msk [vmem:[%s452 + $0x20] sm:$0xff] %vm845, %v799
      %851 = vst.msk [vmem:[%s452 + $0x28] sm:$0xff] %vm845, %v802
      %852 = vst.msk [vmem:[%s452 + $0x30] sm:$0xff] %vm845, %v807
      %853 = vst.msk [vmem:[%s452 + $0x38] sm:$0xff] %vm845, %v810
      %854 = vst.msk [vmem:[%s452 + $0x40] sm:$0xff] %vm845, %v815
      %855 = vst.msk [vmem:[%s452 + $0x48] sm:$0xff] %vm845, %v818
      %856 = vst.msk [vmem:[%s452 + $0x50] sm:$0xff] %vm845, %v823
      %857 = vst.msk [vmem:[%s452 + $0x58] sm:$0xff] %vm845, %v826
      %858 = vst.msk [vmem:[%s452 + $0x60] sm:$0xff] %vm845, %v831
      %859 = vst.msk [vmem:[%s452 + $0x68] sm:$0xff] %vm845, %v834
      %860 = vst.msk [vmem:[%s452 + $0x70] sm:$0xff] %vm845, %v839
      %861 = vst.msk [vmem:[%s452 + $0x78] sm:$0xff] %vm845, %v842
      %v862 = vld [vmem:[%s440] sm:$0xf]
      %v863 = vld [vmem:[%s440 + $0x4] sm:$0xf]
      %v864 = vld [vmem:[%s440 + $0x8] sm:$0xf]
      %v865 = vld [vmem:[%s440 + $0xc] sm:$0xf]
      %v866 = vld [vmem:[%s440 + $0x10] sm:$0xf]
      %v867 = vld [vmem:[%s440 + $0x14] sm:$0xf]
      %v868 = vld [vmem:[%s440 + $0x18] sm:$0xf]
      %v869 = vld [vmem:[%s440 + $0x1c] sm:$0xf]
      %v870 = vld [vmem:[%s440 + $0x20] sm:$0xf]
      %v871 = vld [vmem:[%s440 + $0x24] sm:$0xf]
      %v872 = vld [vmem:[%s440 + $0x28] sm:$0xf]
      %v873 = vld [vmem:[%s440 + $0x2c] sm:$0xf]
      %v874 = vld [vmem:[%s440 + $0x30] sm:$0xf]
      %v875 = vld [vmem:[%s440 + $0x34] sm:$0xf]
      %v876 = vld [vmem:[%s440 + $0x38] sm:$0xf]
      %v877 = vld [vmem:[%s440 + $0x3c] sm:$0xf]
      %v878 = vld [vmem:[%s6] sm:$0xf]
      %v879 = vld [vmem:[%s6 + $0x4] sm:$0xf]
      %v880 = vld [vmem:[%s6 + $0x8] sm:$0xf]
      %v881 = vld [vmem:[%s6 + $0xc] sm:$0xf]
      %v882 = vld [vmem:[%s7] sm:$0x1]
      %v884 = vlaneseq
      %v885 = vshrl.u32 %v884, 7
      %v886 = vsub.s32 0, %v885
      %v887 = vrot.slane %v882, %v886
      %v905 = vunpack.c.l.b16 %v862
      %v906 = vunpack.c.l.b16 %v863
      %v907 = vunpack.c.l.b16 %v864
      %v908 = vunpack.c.l.b16 %v865
      %v909 = vunpack.c.l.b16 %v866
      %v910 = vunpack.c.l.b16 %v867
      %v911 = vunpack.c.l.b16 %v868
      %v912 = vunpack.c.l.b16 %v869
      %v913 = vunpack.c.l.b16 %v870
      %v914 = vunpack.c.l.b16 %v871
      %v915 = vunpack.c.l.b16 %v872
      %v916 = vunpack.c.l.b16 %v873
      %v917 = vunpack.c.l.b16 %v874
      %v918 = vunpack.c.l.b16 %v875
      %v919 = vunpack.c.l.b16 %v876
      %v920 = vunpack.c.l.b16 %v877
      %v921 = vpack.c.b16 %v906, %v905
      %v922 = vpack.c.b16 %v908, %v907
      %v923 = vpack.c.b16 %v910, %v909
      %v924 = vpack.c.b16 %v912, %v911
      %v925 = vpack.c.b16 %v914, %v913
      %v926 = vpack.c.b16 %v916, %v915
      %v927 = vpack.c.b16 %v918, %v917
      %v928 = vpack.c.b16 %v920, %v919
      %v933 = vunpack.c.l.b16 %v878
      %v934 = vunpack.c.l.b16 %v879
      %v935 = vunpack.c.l.b16 %v880
      %v936 = vunpack.c.l.b16 %v881
      %v937 = vpack.c.b16 %v934, %v933
      %v938 = vpack.c.b16 %v936, %v935
      %v942 = vsel %vm845, %v921, 0
      %v945 = vsel %vm845, %v922, 0
      %v948 = vsel %vm845, %v923, 0
      %v951 = vsel %vm845, %v924, 0
      %v954 = vsel %vm845, %v925, 0
      %v957 = vsel %vm845, %v926, 0
      %v960 = vsel %vm845, %v927, 0
      %v963 = vsel %vm845, %v928, 0
      %965 = vmatprep.subr.bf16.mxu0 0
      %966 = vmatpush1.bf16.msra.mxu0 0
      %967 = vmatprep.subr.bf16.mxu0 0
      %968 = vmatpush1.bf16.msra.mxu0 0
      %969 = vmatprep.subr.bf16.mxu0 0
      %970 = vmatpush1.bf16.msra.mxu0 0
      %971 = vmatprep.subr.bf16.mxu0 0
      %972 = vmatpush1.bf16.msra.mxu0 0
      %973 = vmatprep.subr.bf16.mxu0 0
      %974 = vmatpush1.bf16.msra.mxu0 0
      %975 = vmatprep.subr.bf16.mxu0 0
      %976 = vmatpush1.bf16.msra.mxu0 0
      %977 = vmatprep.subr.bf16.mxu0 0
      %978 = vmatpush1.bf16.msra.mxu0 %v938
      %979 = vmatprep.subr.bf16.mxu0 0
      %980 = vmatpush1.bf16.msra.mxu0 %v937
      %981 = vmatprep.subr.bf16.mxu0 0
      %982 = vmatpush2.bf16.msra.mxu0 0
      %983 = vmatprep.subr.bf16.mxu0 0
      %984 = vmatpush2.bf16.msra.mxu0 0
      %985 = vmatprep.subr.bf16.mxu0 0
      %986 = vmatpush2.bf16.msra.mxu0 0
      %987 = vmatprep.subr.bf16.mxu0 0
      %988 = vmatpush2.bf16.msra.mxu0 0
      %989 = vmatprep.subr.bf16.mxu0 0
      %990 = vmatpush2.bf16.msra.mxu0 0
      %991 = vmatprep.subr.bf16.mxu0 0
      %992 = vmatpush2.bf16.msra.mxu0 0
      %993 = vmatprep.subr.bf16.mxu0 0
      %994 = vmatpush2.bf16.msra.mxu0 0
      %995 = vmatprep.subr.bf16.mxu0 0
      %996 = vmatpush2.bf16.msra.mxu0 0
      %997 = vmatprep.mubr.bf16.mxu0 0
      %998 = vmatmul.mubr.bf16.gmra.mxu0 %v942
      %v999 = vpop.f32.mrf.mxu0
      %v1000 = vadd.f32 %v887, %v999
      %v1001 = vpop.f32.mrf.mxu0
      %v1002 = vpop.f32.mrf.mxu0
      %v1003 = vadd.f32 %v887, %v1002
      %v1004 = vpop.f32.mrf.mxu0
      %1005 = vmatprep.mubr.bf16.mxu0 0
      %1006 = vmatmul.mubr.bf16.gmra.mxu0 %v945
      %v1007 = vpop.f32.mrf.mxu0
      %v1008 = vadd.f32 %v887, %v1007
      %v1009 = vpop.f32.mrf.mxu0
      %v1010 = vpop.f32.mrf.mxu0
      %v1011 = vadd.f32 %v887, %v1010
      %v1012 = vpop.f32.mrf.mxu0
      %1013 = vmatprep.mubr.bf16.mxu0 0
      %1014 = vmatmul.mubr.bf16.gmra.mxu0 %v948
      %v1015 = vpop.f32.mrf.mxu0
      %v1016 = vadd.f32 %v887, %v1015
      %v1017 = vpop.f32.mrf.mxu0
      %v1018 = vpop.f32.mrf.mxu0
      %v1019 = vadd.f32 %v887, %v1018
      %v1020 = vpop.f32.mrf.mxu0
      %1021 = vmatprep.mubr.bf16.mxu0 0
      %1022 = vmatmul.mubr.bf16.gmra.mxu0 %v951
      %v1023 = vpop.f32.mrf.mxu0
      %v1024 = vadd.f32 %v887, %v1023
      %v1025 = vpop.f32.mrf.mxu0
      %v1026 = vpop.f32.mrf.mxu0
      %v1027 = vadd.f32 %v887, %v1026
      %v1028 = vpop.f32.mrf.mxu0
      %1029 = vmatprep.mubr.bf16.mxu0 0
      %1030 = vmatmul.mubr.bf16.gmra.mxu0 %v954
      %v1031 = vpop.f32.mrf.mxu0
      %v1032 = vadd.f32 %v887, %v1031
      %v1033 = vpop.f32.mrf.mxu0
      %v1034 = vpop.f32.mrf.mxu0
      %v1035 = vadd.f32 %v887, %v1034
      %v1036 = vpop.f32.mrf.mxu0
      %1037 = vmatprep.mubr.bf16.mxu0 0
      %1038 = vmatmul.mubr.bf16.gmra.mxu0 %v957
      %v1039 = vpop.f32.mrf.mxu0
      %v1040 = vadd.f32 %v887, %v1039
      %v1041 = vpop.f32.mrf.mxu0
      %v1042 = vpop.f32.mrf.mxu0
      %v1043 = vadd.f32 %v887, %v1042
      %v1044 = vpop.f32.mrf.mxu0
      %1045 = vmatprep.mubr.bf16.mxu0 0
      %1046 = vmatmul.mubr.bf16.gmra.mxu0 %v960
      %v1047 = vpop.f32.mrf.mxu0
      %v1048 = vadd.f32 %v887, %v1047
      %v1049 = vpop.f32.mrf.mxu0
      %v1050 = vpop.f32.mrf.mxu0
      %v1051 = vadd.f32 %v887, %v1050
      %v1052 = vpop.f32.mrf.mxu0
      %1053 = vmatprep.mubr.bf16.mxu0 0
      %1054 = vmatmul.mubr.bf16.gmra.mxu0 %v963
      %v1055 = vpop.f32.mrf.mxu0
      %v1056 = vadd.f32 %v887, %v1055
      %v1057 = vpop.f32.mrf.mxu0
      %v1058 = vpop.f32.mrf.mxu0
      %v1059 = vadd.f32 %v887, %v1058
      %v1060 = vpop.f32.mrf.mxu0
      %1061 = vdwg.mxu0
      %v1062 = vmax.f32 %v1000, 0.0
      %v1063 = vmax.f32 %v1003, 0.0
      %v1064 = vmax.f32 %v1008, 0.0
      %v1065 = vmax.f32 %v1011, 0.0
      %v1066 = vmax.f32 %v1016, 0.0
      %v1067 = vmax.f32 %v1019, 0.0
      %v1068 = vmax.f32 %v1024, 0.0
      %v1069 = vmax.f32 %v1027, 0.0
      %v1070 = vmax.f32 %v1032, 0.0
      %v1071 = vmax.f32 %v1035, 0.0
      %v1072 = vmax.f32 %v1040, 0.0
      %v1073 = vmax.f32 %v1043, 0.0
      %v1074 = vmax.f32 %v1048, 0.0
      %v1075 = vmax.f32 %v1051, 0.0
      %v1076 = vmax.f32 %v1056, 0.0
      %v1077 = vmax.f32 %v1059, 0.0
      %v1078 = vpack.c.bf16 %v1063, %v1062
      %v1079 = vpack.c.bf16 %v1065, %v1064
      %v1080 = vpack.c.bf16 %v1067, %v1066
      %v1081 = vpack.c.bf16 %v1069, %v1068
      %v1082 = vpack.c.bf16 %v1071, %v1070
      %v1083 = vpack.c.bf16 %v1073, %v1072
      %v1084 = vpack.c.bf16 %v1075, %v1074
      %v1085 = vpack.c.bf16 %v1077, %v1076
      %v1086 = vld [vmem:[%s8] sm:$0xf]
      %v1087 = vld [vmem:[%s8 + $0x4] sm:$0xf]
      %v1088 = vld [vmem:[%s8 + $0x8] sm:$0xf]
      %v1089 = vld [vmem:[%s8 + $0xc] sm:$0xf]
      %v1090 = vld [vmem:[%s8 + $0x10] sm:$0xf]
      %v1091 = vld [vmem:[%s8 + $0x14] sm:$0xf]
      %v1092 = vld [vmem:[%s8 + $0x18] sm:$0xf]
      %v1093 = vld [vmem:[%s8 + $0x1c] sm:$0xf]
      %v1094 = vld [vmem:[%s9] sm:$0x1]
      %v1096 = vlaneseq
      %v1097 = vshrl.u32 %v1096, 7
      %v1098 = vsub.s32 0, %v1097
      %v1099 = vrot.slane %v1094, %v1098
      %v1109 = vunpack.c.l.b16 %v1086
      %v1110 = vunpack.c.l.b16 %v1087
      %v1111 = vunpack.c.l.b16 %v1088
      %v1112 = vunpack.c.l.b16 %v1089
      %v1113 = vunpack.c.l.b16 %v1090
      %v1114 = vunpack.c.l.b16 %v1091
      %v1115 = vunpack.c.l.b16 %v1092
      %v1116 = vunpack.c.l.b16 %v1093
      %v1117 = vpack.c.b16 %v1110, %v1109
      %v1118 = vpack.c.b16 %v1112, %v1111
      %v1119 = vpack.c.b16 %v1114, %v1113
      %v1120 = vpack.c.b16 %v1116, %v1115
      %v1126 = vsel %vm723, %v1078, 0
      %v1129 = vsel %vm723, %v1079, 0
      %v1132 = vsel %vm723, %v1080, 0
      %v1135 = vsel %vm723, %v1081, 0
      %v1138 = vsel %vm723, %v1082, 0
      %v1141 = vsel %vm723, %v1083, 0
      %v1144 = vsel %vm723, %v1084, 0
      %v1147 = vsel %vm723, %v1085, 0
      %1149 = vmatprep.subr.bf16.mxu0 0
      %1150 = vmatpush1.bf16.msra.mxu0 0
      %1151 = vmatprep.subr.bf16.mxu0 0
      %1152 = vmatpush1.bf16.msra.mxu0 0
      %1153 = vmatprep.subr.bf16.mxu0 0
      %1154 = vmatpush1.bf16.msra.mxu0 0
      %1155 = vmatprep.subr.bf16.mxu0 0
      %1156 = vmatpush1.bf16.msra.mxu0 0
      %1157 = vmatprep.subr.bf16.mxu0 0
      %1158 = vmatpush1.bf16.msra.mxu0 %v1120
      %1159 = vmatprep.subr.bf16.mxu0 0
      %1160 = vmatpush1.bf16.msra.mxu0 %v1119
      %1161 = vmatprep.subr.bf16.mxu0 0
      %1162 = vmatpush1.bf16.msra.mxu0 %v1118
      %1163 = vmatprep.subr.bf16.mxu0 0
      %1164 = vmatpush1.bf16.msra.mxu0 %v1117
      %1165 = vmatprep.subr.bf16.mxu0 0
      %1166 = vmatpush2.bf16.msra.mxu0 0
      %1167 = vmatprep.subr.bf16.mxu0 0
      %1168 = vmatpush2.bf16.msra.mxu0 0
      %1169 = vmatprep.subr.bf16.mxu0 0
      %1170 = vmatpush2.bf16.msra.mxu0 0
      %1171 = vmatprep.subr.bf16.mxu0 0
      %1172 = vmatpush2.bf16.msra.mxu0 0
      %1173 = vmatprep.subr.bf16.mxu0 0
      %1174 = vmatpush2.bf16.msra.mxu0 0
      %1175 = vmatprep.subr.bf16.mxu0 0
      %1176 = vmatpush2.bf16.msra.mxu0 0
      %1177 = vmatprep.subr.bf16.mxu0 0
      %1178 = vmatpush2.bf16.msra.mxu0 0
      %1179 = vmatprep.subr.bf16.mxu0 0
      %1180 = vmatpush2.bf16.msra.mxu0 0
      %1181 = vmatprep.mubr.bf16.mxu0 0
      %1182 = vmatmul.mubr.bf16.gmra.mxu0 %v1126
      %v1183 = vpop.f32.mrf.mxu0
      %v1184 = vadd.f32 %v1099, %v1183
      %v1185 = vpop.f32.mrf.mxu0
      %v1186 = vpop.f32.mrf.mxu0
      %v1187 = vadd.f32 %v1099, %v1186
      %v1188 = vpop.f32.mrf.mxu0
      %1189 = vmatprep.mubr.bf16.mxu0 0
      %1190 = vmatmul.mubr.bf16.gmra.mxu0 %v1129
      %v1191 = vpop.f32.mrf.mxu0
      %v1192 = vadd.f32 %v1099, %v1191
      %v1193 = vpop.f32.mrf.mxu0
      %v1194 = vpop.f32.mrf.mxu0
      %v1195 = vadd.f32 %v1099, %v1194
      %v1196 = vpop.f32.mrf.mxu0
      %1197 = vmatprep.mubr.bf16.mxu0 0
      %1198 = vmatmul.mubr.bf16.gmra.mxu0 %v1132
      %v1199 = vpop.f32.mrf.mxu0
      %v1200 = vadd.f32 %v1099, %v1199
      %v1201 = vpop.f32.mrf.mxu0
      %v1202 = vpop.f32.mrf.mxu0
      %v1203 = vadd.f32 %v1099, %v1202
      %v1204 = vpop.f32.mrf.mxu0
      %1205 = vmatprep.mubr.bf16.mxu0 0
      %1206 = vmatmul.mubr.bf16.gmra.mxu0 %v1135
      %v1207 = vpop.f32.mrf.mxu0
      %v1208 = vadd.f32 %v1099, %v1207
      %v1209 = vpop.f32.mrf.mxu0
      %v1210 = vpop.f32.mrf.mxu0
      %v1211 = vadd.f32 %v1099, %v1210
      %v1212 = vpop.f32.mrf.mxu0
      %1213 = vmatprep.mubr.bf16.mxu0 0
      %1214 = vmatmul.mubr.bf16.gmra.mxu0 %v1138
      %v1215 = vpop.f32.mrf.mxu0
      %v1216 = vadd.f32 %v1099, %v1215
      %v1217 = vpop.f32.mrf.mxu0
      %v1218 = vpop.f32.mrf.mxu0
      %v1219 = vadd.f32 %v1099, %v1218
      %v1220 = vpop.f32.mrf.mxu0
      %1221 = vmatprep.mubr.bf16.mxu0 0
      %1222 = vmatmul.mubr.bf16.gmra.mxu0 %v1141
      %v1223 = vpop.f32.mrf.mxu0
      %v1224 = vadd.f32 %v1099, %v1223
      %v1225 = vpop.f32.mrf.mxu0
      %v1226 = vpop.f32.mrf.mxu0
      %v1227 = vadd.f32 %v1099, %v1226
      %v1228 = vpop.f32.mrf.mxu0
      %1229 = vmatprep.mubr.bf16.mxu0 0
      %1230 = vmatmul.mubr.bf16.gmra.mxu0 %v1144
      %v1231 = vpop.f32.mrf.mxu0
      %v1232 = vadd.f32 %v1099, %v1231
      %v1233 = vpop.f32.mrf.mxu0
      %v1234 = vpop.f32.mrf.mxu0
      %v1235 = vadd.f32 %v1099, %v1234
      %v1236 = vpop.f32.mrf.mxu0
      %1237 = vmatprep.mubr.bf16.mxu0 0
      %1238 = vmatmul.mubr.bf16.gmra.mxu0 %v1147
      %v1239 = vpop.f32.mrf.mxu0
      %v1240 = vadd.f32 %v1099, %v1239
      %v1241 = vpop.f32.mrf.mxu0
      %v1242 = vpop.f32.mrf.mxu0
      %v1243 = vadd.f32 %v1099, %v1242
      %v1244 = vpop.f32.mrf.mxu0
      %1245 = vdwg.mxu0
      %v1246 = vpack.c.bf16 %v1187, %v1184
      %v1247 = vpack.c.bf16 %v1195, %v1192
      %v1248 = vpack.c.bf16 %v1203, %v1200
      %v1249 = vpack.c.bf16 %v1211, %v1208
      %v1250 = vpack.c.bf16 %v1219, %v1216
      %v1251 = vpack.c.bf16 %v1227, %v1224
      %v1252 = vpack.c.bf16 %v1235, %v1232
      %v1253 = vpack.c.bf16 %v1243, %v1240
      %v1262 = vunpack.c.l.b16 %v1246
      %v1263 = vunpack.c.h.b16 %v1246
      %v1264 = vunpack.c.l.b16 %v1247
      %v1265 = vunpack.c.h.b16 %v1247
      %v1266 = vunpack.c.l.b16 %v1248
      %v1267 = vunpack.c.h.b16 %v1248
      %v1268 = vunpack.c.l.b16 %v1249
      %v1269 = vunpack.c.h.b16 %v1249
      %v1270 = vunpack.c.l.b16 %v1250
      %v1271 = vunpack.c.h.b16 %v1250
      %v1272 = vunpack.c.l.b16 %v1251
      %v1273 = vunpack.c.h.b16 %v1251
      %v1274 = vunpack.c.l.b16 %v1252
      %v1275 = vunpack.c.h.b16 %v1252
      %v1276 = vunpack.c.l.b16 %v1253
      %v1277 = vunpack.c.h.b16 %v1253
      %v1278 = vpack.c.b16 %v1262, %v1262
      %v1279 = vpack.c.b16 %v1263, %v1263
      %v1280 = vpack.c.b16 %v1264, %v1264
      %v1281 = vpack.c.b16 %v1265, %v1265
      %v1282 = vpack.c.b16 %v1266, %v1266
      %v1283 = vpack.c.b16 %v1267, %v1267
      %v1284 = vpack.c.b16 %v1268, %v1268
      %v1285 = vpack.c.b16 %v1269, %v1269
      %v1286 = vpack.c.b16 %v1270, %v1270
      %v1287 = vpack.c.b16 %v1271, %v1271
      %v1288 = vpack.c.b16 %v1272, %v1272
      %v1289 = vpack.c.b16 %v1273, %v1273
      %v1290 = vpack.c.b16 %v1274, %v1274
      %v1291 = vpack.c.b16 %v1275, %v1275
      %v1292 = vpack.c.b16 %v1276, %v1276
      %v1293 = vpack.c.b16 %v1277, %v1277
      %vm1310 = vcmask 519168
      %1311 = vst.msk [vmem:[%s458] sm:$0xf] %vm1310, %v1278
      %1312 = vst.msk [vmem:[%s458 + $0x4] sm:$0xf] %vm1310, %v1279
      %1313 = vst.msk [vmem:[%s458 + $0x8] sm:$0xf] %vm1310, %v1280
      %1314 = vst.msk [vmem:[%s458 + $0xc] sm:$0xf] %vm1310, %v1281
      %1315 = vst.msk [vmem:[%s458 + $0x10] sm:$0xf] %vm1310, %v1282
      %1316 = vst.msk [vmem:[%s458 + $0x14] sm:$0xf] %vm1310, %v1283
      %1317 = vst.msk [vmem:[%s458 + $0x18] sm:$0xf] %vm1310, %v1284
      %1318 = vst.msk [vmem:[%s458 + $0x1c] sm:$0xf] %vm1310, %v1285
      %1319 = vst.msk [vmem:[%s458 + $0x20] sm:$0xf] %vm1310, %v1286
      %1320 = vst.msk [vmem:[%s458 + $0x24] sm:$0xf] %vm1310, %v1287
      %1321 = vst.msk [vmem:[%s458 + $0x28] sm:$0xf] %vm1310, %v1288
      %1322 = vst.msk [vmem:[%s458 + $0x2c] sm:$0xf] %vm1310, %v1289
      %1323 = vst.msk [vmem:[%s458 + $0x30] sm:$0xf] %vm1310, %v1290
      %1324 = vst.msk [vmem:[%s458 + $0x34] sm:$0xf] %vm1310, %v1291
      %1325 = vst.msk [vmem:[%s458 + $0x38] sm:$0xf] %vm1310, %v1292
      %1326 = vst.msk [vmem:[%s458 + $0x3c] sm:$0xf] %vm1310, %v1293
      %v1327 = vpack.c.bf16 %v786, %v783
      %v1328 = vpack.c.bf16 %v794, %v791
      %v1329 = vpack.c.bf16 %v802, %v799
      %v1330 = vpack.c.bf16 %v810, %v807
      %v1331 = vpack.c.bf16 %v818, %v815
      %v1332 = vpack.c.bf16 %v826, %v823
      %v1333 = vpack.c.bf16 %v834, %v831
      %v1334 = vpack.c.bf16 %v842, %v839
      %v1335 = vld [vmem:[%s6] sm:$0xf]
      %v1336 = vld [vmem:[%s6 + $0x4] sm:$0xf]
      %v1337 = vld [vmem:[%s6 + $0x8] sm:$0xf]
      %v1338 = vld [vmem:[%s6 + $0xc] sm:$0xf]
      %v1339 = vld [vmem:[%s7] sm:$0x1]
      %v1341 = vlaneseq
      %v1342 = vshrl.u32 %v1341, 7
      %v1343 = vsub.s32 0, %v1342
      %v1344 = vrot.slane %v1339, %v1343
      %v1350 = vunpack.c.l.b16 %v1335
      %v1351 = vunpack.c.l.b16 %v1336
      %v1352 = vunpack.c.l.b16 %v1337
      %v1353 = vunpack.c.l.b16 %v1338
      %v1354 = vpack.c.b16 %v1351, %v1350
      %v1355 = vpack.c.b16 %v1353, %v1352
      %v1359 = vsel %vm845, %v1327, 0
      %v1362 = vsel %vm845, %v1328, 0
      %v1365 = vsel %vm845, %v1329, 0
      %v1368 = vsel %vm845, %v1330, 0
      %v1371 = vsel %vm845, %v1331, 0
      %v1374 = vsel %vm845, %v1332, 0
      %v1377 = vsel %vm845, %v1333, 0
      %v1380 = vsel %vm845, %v1334, 0
      %1382 = vmatprep.subr.bf16.mxu0 0
      %1383 = vmatpush1.bf16.msra.mxu0 0
      %1384 = vmatprep.subr.bf16.mxu0 0
      %1385 = vmatpush1.bf16.msra.mxu0 0
      %1386 = vmatprep.subr.bf16.mxu0 0
      %1387 = vmatpush1.bf16.msra.mxu0 0
      %1388 = vmatprep.subr.bf16.mxu0 0
      %1389 = vmatpush1.bf16.msra.mxu0 0
      %1390 = vmatprep.subr.bf16.mxu0 0
      %1391 = vmatpush1.bf16.msra.mxu0 0
      %1392 = vmatprep.subr.bf16.mxu0 0
      %1393 = vmatpush1.bf16.msra.mxu0 0
      %1394 = vmatprep.subr.bf16.mxu0 0
      %1395 = vmatpush1.bf16.msra.mxu0 %v1355
      %1396 = vmatprep.subr.bf16.mxu0 0
      %1397 = vmatpush1.bf16.msra.mxu0 %v1354
      %1398 = vmatprep.subr.bf16.mxu0 0
      %1399 = vmatpush2.bf16.msra.mxu0 0
      %1400 = vmatprep.subr.bf16.mxu0 0
      %1401 = vmatpush2.bf16.msra.mxu0 0
      %1402 = vmatprep.subr.bf16.mxu0 0
      %1403 = vmatpush2.bf16.msra.mxu0 0
      %1404 = vmatprep.subr.bf16.mxu0 0
      %1405 = vmatpush2.bf16.msra.mxu0 0
      %1406 = vmatprep.subr.bf16.mxu0 0
      %1407 = vmatpush2.bf16.msra.mxu0 0
      %1408 = vmatprep.subr.bf16.mxu0 0
      %1409 = vmatpush2.bf16.msra.mxu0 0
      %1410 = vmatprep.subr.bf16.mxu0 0
      %1411 = vmatpush2.bf16.msra.mxu0 0
      %1412 = vmatprep.subr.bf16.mxu0 0
      %1413 = vmatpush2.bf16.msra.mxu0 0
      %1414 = vmatprep.mubr.bf16.mxu0 0
      %1415 = vmatmul.mubr.bf16.gmra.mxu0 %v1359
      %v1416 = vpop.f32.mrf.mxu0
      %v1417 = vadd.f32 %v1344, %v1416
      %v1418 = vpop.f32.mrf.mxu0
      %v1419 = vpop.f32.mrf.mxu0
      %v1420 = vadd.f32 %v1344, %v1419
      %v1421 = vpop.f32.mrf.mxu0
      %1422 = vmatprep.mubr.bf16.mxu0 0
      %1423 = vmatmul.mubr.bf16.gmra.mxu0 %v1362
      %v1424 = vpop.f32.mrf.mxu0
      %v1425 = vadd.f32 %v1344, %v1424
      %v1426 = vpop.f32.mrf.mxu0
      %v1427 = vpop.f32.mrf.mxu0
      %v1428 = vadd.f32 %v1344, %v1427
      %v1429 = vpop.f32.mrf.mxu0
      %1430 = vmatprep.mubr.bf16.mxu0 0
      %1431 = vmatmul.mubr.bf16.gmra.mxu0 %v1365
      %v1432 = vpop.f32.mrf.mxu0
      %v1433 = vadd.f32 %v1344, %v1432
      %v1434 = vpop.f32.mrf.mxu0
      %v1435 = vpop.f32.mrf.mxu0
      %v1436 = vadd.f32 %v1344, %v1435
      %v1437 = vpop.f32.mrf.mxu0
      %1438 = vmatprep.mubr.bf16.mxu0 0
      %1439 = vmatmul.mubr.bf16.gmra.mxu0 %v1368
      %v1440 = vpop.f32.mrf.mxu0
      %v1441 = vadd.f32 %v1344, %v1440
      %v1442 = vpop.f32.mrf.mxu0
      %v1443 = vpop.f32.mrf.mxu0
      %v1444 = vadd.f32 %v1344, %v1443
      %v1445 = vpop.f32.mrf.mxu0
      %1446 = vmatprep.mubr.bf16.mxu0 0
      %1447 = vmatmul.mubr.bf16.gmra.mxu0 %v1371
      %v1448 = vpop.f32.mrf.mxu0
      %v1449 = vadd.f32 %v1344, %v1448
      %v1450 = vpop.f32.mrf.mxu0
      %v1451 = vpop.f32.mrf.mxu0
      %v1452 = vadd.f32 %v1344, %v1451
      %v1453 = vpop.f32.mrf.mxu0
      %1454 = vmatprep.mubr.bf16.mxu0 0
      %1455 = vmatmul.mubr.bf16.gmra.mxu0 %v1374
      %v1456 = vpop.f32.mrf.mxu0
      %v1457 = vadd.f32 %v1344, %v1456
      %v1458 = vpop.f32.mrf.mxu0
      %v1459 = vpop.f32.mrf.mxu0
      %v1460 = vadd.f32 %v1344, %v1459
      %v1461 = vpop.f32.mrf.mxu0
      %1462 = vmatprep.mubr.bf16.mxu0 0
      %1463 = vmatmul.mubr.bf16.gmra.mxu0 %v1377
      %v1464 = vpop.f32.mrf.mxu0
      %v1465 = vadd.f32 %v1344, %v1464
      %v1466 = vpop.f32.mrf.mxu0
      %v1467 = vpop.f32.mrf.mxu0
      %v1468 = vadd.f32 %v1344, %v1467
      %v1469 = vpop.f32.mrf.mxu0
      %1470 = vmatprep.mubr.bf16.mxu0 0
      %1471 = vmatmul.mubr.bf16.gmra.mxu0 %v1380
      %v1472 = vpop.f32.mrf.mxu0
      %v1473 = vadd.f32 %v1344, %v1472
      %v1474 = vpop.f32.mrf.mxu0
      %v1475 = vpop.f32.mrf.mxu0
      %v1476 = vadd.f32 %v1344, %v1475
      %v1477 = vpop.f32.mrf.mxu0
      %1478 = vdwg.mxu0
      %v1479 = vmax.f32 %v1417, 0.0
      %v1480 = vmax.f32 %v1420, 0.0
      %v1481 = vmax.f32 %v1425, 0.0
      %v1482 = vmax.f32 %v1428, 0.0
      %v1483 = vmax.f32 %v1433, 0.0
      %v1484 = vmax.f32 %v1436, 0.0
      %v1485 = vmax.f32 %v1441, 0.0
      %v1486 = vmax.f32 %v1444, 0.0
      %v1487 = vmax.f32 %v1449, 0.0
      %v1488 = vmax.f32 %v1452, 0.0
      %v1489 = vmax.f32 %v1457, 0.0
      %v1490 = vmax.f32 %v1460, 0.0
      %v1491 = vmax.f32 %v1465, 0.0
      %v1492 = vmax.f32 %v1468, 0.0
      %v1493 = vmax.f32 %v1473, 0.0
      %v1494 = vmax.f32 %v1476, 0.0
      %v1495 = vpack.c.bf16 %v1480, %v1479
      %v1496 = vpack.c.bf16 %v1482, %v1481
      %v1497 = vpack.c.bf16 %v1484, %v1483
      %v1498 = vpack.c.bf16 %v1486, %v1485
      %v1499 = vpack.c.bf16 %v1488, %v1487
      %v1500 = vpack.c.bf16 %v1490, %v1489
      %v1501 = vpack.c.bf16 %v1492, %v1491
      %v1502 = vpack.c.bf16 %v1494, %v1493
      %v1503 = vld [vmem:[%s8] sm:$0xf]
      %v1504 = vld [vmem:[%s8 + $0x4] sm:$0xf]
      %v1505 = vld [vmem:[%s8 + $0x8] sm:$0xf]
      %v1506 = vld [vmem:[%s8 + $0xc] sm:$0xf]
      %v1507 = vld [vmem:[%s8 + $0x10] sm:$0xf]
      %v1508 = vld [vmem:[%s8 + $0x14] sm:$0xf]
      %v1509 = vld [vmem:[%s8 + $0x18] sm:$0xf]
      %v1510 = vld [vmem:[%s8 + $0x1c] sm:$0xf]
      %v1511 = vld [vmem:[%s9] sm:$0x1]
      %v1513 = vlaneseq
      %v1514 = vshrl.u32 %v1513, 7
      %v1515 = vsub.s32 0, %v1514
      %v1516 = vrot.slane %v1511, %v1515
      %v1526 = vunpack.c.l.b16 %v1503
      %v1527 = vunpack.c.l.b16 %v1504
      %v1528 = vunpack.c.l.b16 %v1505
      %v1529 = vunpack.c.l.b16 %v1506
      %v1530 = vunpack.c.l.b16 %v1507
      %v1531 = vunpack.c.l.b16 %v1508
      %v1532 = vunpack.c.l.b16 %v1509
      %v1533 = vunpack.c.l.b16 %v1510
      %v1534 = vpack.c.b16 %v1527, %v1526
      %v1535 = vpack.c.b16 %v1529, %v1528
      %v1536 = vpack.c.b16 %v1531, %v1530
      %v1537 = vpack.c.b16 %v1533, %v1532
      %v1543 = vsel %vm723, %v1495, 0
      %v1546 = vsel %vm723, %v1496, 0
      %v1549 = vsel %vm723, %v1497, 0
      %v1552 = vsel %vm723, %v1498, 0
      %v1555 = vsel %vm723, %v1499, 0
      %v1558 = vsel %vm723, %v1500, 0
      %v1561 = vsel %vm723, %v1501, 0
      %v1564 = vsel %vm723, %v1502, 0
      %1566 = vmatprep.subr.bf16.mxu0 0
      %1567 = vmatpush1.bf16.msra.mxu0 0
      %1568 = vmatprep.subr.bf16.mxu0 0
      %1569 = vmatpush1.bf16.msra.mxu0 0
      %1570 = vmatprep.subr.bf16.mxu0 0
      %1571 = vmatpush1.bf16.msra.mxu0 0
      %1572 = vmatprep.subr.bf16.mxu0 0
      %1573 = vmatpush1.bf16.msra.mxu0 0
      %1574 = vmatprep.subr.bf16.mxu0 0
      %1575 = vmatpush1.bf16.msra.mxu0 %v1537
      %1576 = vmatprep.subr.bf16.mxu0 0
      %1577 = vmatpush1.bf16.msra.mxu0 %v1536
      %1578 = vmatprep.subr.bf16.mxu0 0
      %1579 = vmatpush1.bf16.msra.mxu0 %v1535
      %1580 = vmatprep.subr.bf16.mxu0 0
      %1581 = vmatpush1.bf16.msra.mxu0 %v1534
      %1582 = vmatprep.subr.bf16.mxu0 0
      %1583 = vmatpush2.bf16.msra.mxu0 0
      %1584 = vmatprep.subr.bf16.mxu0 0
      %1585 = vmatpush2.bf16.msra.mxu0 0
      %1586 = vmatprep.subr.bf16.mxu0 0
      %1587 = vmatpush2.bf16.msra.mxu0 0
      %1588 = vmatprep.subr.bf16.mxu0 0
      %1589 = vmatpush2.bf16.msra.mxu0 0
      %1590 = vmatprep.subr.bf16.mxu0 0
      %1591 = vmatpush2.bf16.msra.mxu0 0
      %1592 = vmatprep.subr.bf16.mxu0 0
      %1593 = vmatpush2.bf16.msra.mxu0 0
      %1594 = vmatprep.subr.bf16.mxu0 0
      %1595 = vmatpush2.bf16.msra.mxu0 0
      %1596 = vmatprep.subr.bf16.mxu0 0
      %1597 = vmatpush2.bf16.msra.mxu0 0
      %1598 = vmatprep.mubr.bf16.mxu0 0
      %1599 = vmatmul.mubr.bf16.gmra.mxu0 %v1543
      %v1600 = vpop.f32.mrf.mxu0
      %v1601 = vadd.f32 %v1516, %v1600
      %v1602 = vpop.f32.mrf.mxu0
      %v1603 = vpop.f32.mrf.mxu0
      %v1604 = vadd.f32 %v1516, %v1603
      %v1605 = vpop.f32.mrf.mxu0
      %1606 = vmatprep.mubr.bf16.mxu0 0
      %1607 = vmatmul.mubr.bf16.gmra.mxu0 %v1546
      %v1608 = vpop.f32.mrf.mxu0
      %v1609 = vadd.f32 %v1516, %v1608
      %v1610 = vpop.f32.mrf.mxu0
      %v1611 = vpop.f32.mrf.mxu0
      %v1612 = vadd.f32 %v1516, %v1611
      %v1613 = vpop.f32.mrf.mxu0
      %1614 = vmatprep.mubr.bf16.mxu0 0
      %1615 = vmatmul.mubr.bf16.gmra.mxu0 %v1549
      %v1616 = vpop.f32.mrf.mxu0
      %v1617 = vadd.f32 %v1516, %v1616
      %v1618 = vpop.f32.mrf.mxu0
      %v1619 = vpop.f32.mrf.mxu0
      %v1620 = vadd.f32 %v1516, %v1619
      %v1621 = vpop.f32.mrf.mxu0
      %1622 = vmatprep.mubr.bf16.mxu0 0
      %1623 = vmatmul.mubr.bf16.gmra.mxu0 %v1552
      %v1624 = vpop.f32.mrf.mxu0
      %v1625 = vadd.f32 %v1516, %v1624
      %v1626 = vpop.f32.mrf.mxu0
      %v1627 = vpop.f32.mrf.mxu0
      %v1628 = vadd.f32 %v1516, %v1627
      %v1629 = vpop.f32.mrf.mxu0
      %1630 = vmatprep.mubr.bf16.mxu0 0
      %1631 = vmatmul.mubr.bf16.gmra.mxu0 %v1555
      %v1632 = vpop.f32.mrf.mxu0
      %v1633 = vadd.f32 %v1516, %v1632
      %v1634 = vpop.f32.mrf.mxu0
      %v1635 = vpop.f32.mrf.mxu0
      %v1636 = vadd.f32 %v1516, %v1635
      %v1637 = vpop.f32.mrf.mxu0
      %1638 = vmatprep.mubr.bf16.mxu0 0
      %1639 = vmatmul.mubr.bf16.gmra.mxu0 %v1558
      %v1640 = vpop.f32.mrf.mxu0
      %v1641 = vadd.f32 %v1516, %v1640
      %v1642 = vpop.f32.mrf.mxu0
      %v1643 = vpop.f32.mrf.mxu0
      %v1644 = vadd.f32 %v1516, %v1643
      %v1645 = vpop.f32.mrf.mxu0
      %1646 = vmatprep.mubr.bf16.mxu0 0
      %1647 = vmatmul.mubr.bf16.gmra.mxu0 %v1561
      %v1648 = vpop.f32.mrf.mxu0
      %v1649 = vadd.f32 %v1516, %v1648
      %v1650 = vpop.f32.mrf.mxu0
      %v1651 = vpop.f32.mrf.mxu0
      %v1652 = vadd.f32 %v1516, %v1651
      %v1653 = vpop.f32.mrf.mxu0
      %1654 = vmatprep.mubr.bf16.mxu0 0
      %1655 = vmatmul.mubr.bf16.gmra.mxu0 %v1564
      %v1656 = vpop.f32.mrf.mxu0
      %v1657 = vadd.f32 %v1516, %v1656
      %v1658 = vpop.f32.mrf.mxu0
      %v1659 = vpop.f32.mrf.mxu0
      %v1660 = vadd.f32 %v1516, %v1659
      %v1661 = vpop.f32.mrf.mxu0
      %1662 = vdwg.mxu0
      %v1663 = vpack.c.bf16 %v1604, %v1601
      %v1664 = vpack.c.bf16 %v1612, %v1609
      %v1665 = vpack.c.bf16 %v1620, %v1617
      %v1666 = vpack.c.bf16 %v1628, %v1625
      %v1667 = vpack.c.bf16 %v1636, %v1633
      %v1668 = vpack.c.bf16 %v1644, %v1641
      %v1669 = vpack.c.bf16 %v1652, %v1649
      %v1670 = vpack.c.bf16 %v1660, %v1657
      %v1679 = vunpack.c.l.b16 %v1663
      %v1680 = vunpack.c.h.b16 %v1663
      %v1681 = vunpack.c.l.b16 %v1664
      %v1682 = vunpack.c.h.b16 %v1664
      %v1683 = vunpack.c.l.b16 %v1665
      %v1684 = vunpack.c.h.b16 %v1665
      %v1685 = vunpack.c.l.b16 %v1666
      %v1686 = vunpack.c.h.b16 %v1666
      %v1687 = vunpack.c.l.b16 %v1667
      %v1688 = vunpack.c.h.b16 %v1667
      %v1689 = vunpack.c.l.b16 %v1668
      %v1690 = vunpack.c.h.b16 %v1668
      %v1691 = vunpack.c.l.b16 %v1669
      %v1692 = vunpack.c.h.b16 %v1669
      %v1693 = vunpack.c.l.b16 %v1670
      %v1694 = vunpack.c.h.b16 %v1670
      %v1695 = vpack.c.b16 %v1679, %v1679
      %v1696 = vpack.c.b16 %v1680, %v1680
      %v1697 = vpack.c.b16 %v1681, %v1681
      %v1698 = vpack.c.b16 %v1682, %v1682
      %v1699 = vpack.c.b16 %v1683, %v1683
      %v1700 = vpack.c.b16 %v1684, %v1684
      %v1701 = vpack.c.b16 %v1685, %v1685
      %v1702 = vpack.c.b16 %v1686, %v1686
      %v1703 = vpack.c.b16 %v1687, %v1687
      %v1704 = vpack.c.b16 %v1688, %v1688
      %v1705 = vpack.c.b16 %v1689, %v1689
      %v1706 = vpack.c.b16 %v1690, %v1690
      %v1707 = vpack.c.b16 %v1691, %v1691
      %v1708 = vpack.c.b16 %v1692, %v1692
      %v1709 = vpack.c.b16 %v1693, %v1693
      %v1710 = vpack.c.b16 %v1694, %v1694
      %1727 = vst.msk [vmem:[%s464] sm:$0xf] %vm1310, %v1695
      %1728 = vst.msk [vmem:[%s464 + $0x4] sm:$0xf] %vm1310, %v1696
      %1729 = vst.msk [vmem:[%s464 + $0x8] sm:$0xf] %vm1310, %v1697
      %1730 = vst.msk [vmem:[%s464 + $0xc] sm:$0xf] %vm1310, %v1698
      %1731 = vst.msk [vmem:[%s464 + $0x10] sm:$0xf] %vm1310, %v1699
      %1732 = vst.msk [vmem:[%s464 + $0x14] sm:$0xf] %vm1310, %v1700
      %1733 = vst.msk [vmem:[%s464 + $0x18] sm:$0xf] %vm1310, %v1701
      %1734 = vst.msk [vmem:[%s464 + $0x1c] sm:$0xf] %vm1310, %v1702
      %1735 = vst.msk [vmem:[%s464 + $0x20] sm:$0xf] %vm1310, %v1703
      %1736 = vst.msk [vmem:[%s464 + $0x24] sm:$0xf] %vm1310, %v1704
      %1737 = vst.msk [vmem:[%s464 + $0x28] sm:$0xf] %vm1310, %v1705
      %1738 = vst.msk [vmem:[%s464 + $0x2c] sm:$0xf] %vm1310, %v1706
      %1739 = vst.msk [vmem:[%s464 + $0x30] sm:$0xf] %vm1310, %v1707
      %1740 = vst.msk [vmem:[%s464 + $0x34] sm:$0xf] %vm1310, %v1708
      %1741 = vst.msk [vmem:[%s464 + $0x38] sm:$0xf] %vm1310, %v1709
      %1742 = vst.msk [vmem:[%s464 + $0x3c] sm:$0xf] %vm1310, %v1710
      %s1743 = smul.u32 16, %s24
      %p1744 = scmp.lt.s32.totalorder %s1743, 31
      %s1745 = scalar_select %p1744, %s1743, 31
      %s1746 = smul.addr %s1745, 8
      %s1747 = scalar_lea.vmem %s10, %s1746
      %s1748 = smul.u32 16, %s24
      %p1749 = scmp.lt.s32.totalorder %s1748, 31
      %s1750 = scalar_select %p1749, %s1748, 31
      %s1751 = smul.addr %s1750, 4
      %s1752 = scalar_lea.vmem %s11, %s1751
      %s1753 = smul.u32 16, %s24
      %p1754 = scmp.lt.s32.totalorder %s1753, 31
      %s1755 = scalar_select %p1754, %s1753, 31
      %s1756 = smul.addr %s1755, 4
      %s1757 = scalar_lea.vmem %s12, %s1756
      // Predicated region
      $region61: #{gaan_forward.2} parent=59 // pred_check
        %p1758 = pneg %p262
      $region62: #{gaan_forward.2} parent=59 // pred_check_branch
        %1760 = sbr.rel (%p1758) target = $region64
      $region63: #{gaan_forward.2} parent=59 // pred_region
        %s1761 = smul.u32 16, %s24
      $region64: #{gaan_forward.2} parent=59 // pred_fallthru
        _
      // Predicated region
      $region65: #{gaan_forward.2} parent=59 // pred_check
        %p1762 = pneg %p288
      $region66: #{gaan_forward.2} parent=59 // pred_check_branch
        %1764 = sbr.rel (%p1762) target = $region68
      $region67: #{gaan_forward.2} parent=59 // pred_region
        %s1765 = smul.u32 16, %s24
      $region68: #{gaan_forward.2} parent=59 // pred_fallthru
        _
      // Predicated region
      $region69: #{gaan_forward.2} parent=59 // pred_check
        %p1766 = pneg %p314
      $region70: #{gaan_forward.2} parent=59 // pred_check_branch
        %1768 = sbr.rel (%p1766) target = $region72
      $region71: #{gaan_forward.2} parent=59 // pred_region
        %s1769 = smul.u32 16, %s24
      $region72: #{gaan_forward.2} parent=59 // pred_fallthru
        _
    $region60: #{gaan_forward.2} parent=5 // pred_fallthru
      _
    %p1770 = scmp.le.s32.totalorder 2, %s19
    // Predicated region
    $region73: #{gaan_forward.2} parent=5 // pred_check
      %p1771 = pneg %p1770
    $region74: #{gaan_forward.2} parent=5 // pred_check_branch
      %1773 = sbr.rel (%p1771) target = $region76
    $region75: #{gaan_forward.2} parent=5 // pred_region
      %s1774 = ssub.s32 %s19, 2
      // Predicated region
      $region77: #{gaan_forward.2} parent=75 // pred_check
        %p1775 = pneg %p268
      $region78: #{gaan_forward.2} parent=75 // pred_check_branch
        %1777 = sbr.rel (%p1775) target = $region80
      $region79: #{gaan_forward.2} parent=75 // pred_region
        %s1778 = smul.u32 16, %s25
        %p1779 = scmp.lt.s32.totalorder %s1778, 31
        %s1780 = scalar_select %p1779, %s1778, 31
        %s1781 = smul.addr %s1780, 8
        %s1782 = scalar_lea.vmem %s10, %s1781
      $region80: #{gaan_forward.2} parent=75 // pred_fallthru
        _
      // Predicated region
      $region81: #{gaan_forward.2} parent=75 // pred_check
        %p1783 = pneg %p294
      $region82: #{gaan_forward.2} parent=75 // pred_check_branch
        %1785 = sbr.rel (%p1783) target = $region84
      $region83: #{gaan_forward.2} parent=75 // pred_region
        %s1786 = smul.u32 16, %s25
        %p1787 = scmp.lt.s32.totalorder %s1786, 31
        %s1788 = scalar_select %p1787, %s1786, 31
        %s1789 = smul.addr %s1788, 4
        %s1790 = scalar_lea.vmem %s11, %s1789
      $region84: #{gaan_forward.2} parent=75 // pred_fallthru
        _
      // Predicated region
      $region85: #{gaan_forward.2} parent=75 // pred_check
        %p1791 = pneg %p320
      $region86: #{gaan_forward.2} parent=75 // pred_check_branch
        %1793 = sbr.rel (%p1791) target = $region88
      $region87: #{gaan_forward.2} parent=75 // pred_region
        %s1794 = smul.u32 16, %s25
        %p1795 = scmp.lt.s32.totalorder %s1794, 31
        %s1796 = scalar_select %p1795, %s1794, 31
        %s1797 = smul.addr %s1796, 4
        %s1798 = scalar_lea.vmem %s12, %s1797
      $region88: #{gaan_forward.2} parent=75 // pred_fallthru
        _
    $region76: #{gaan_forward.2} parent=5 // pred_fallthru
      _
  $region6: #{gaan_forward.2} parent=0 // loop_footer
    %s23 = sadd.s32 1, %s19
  $region7: #{gaan_forward.2} parent=0 // loop_footer_branch
    %18 = sbr.rel target = $region3
  $region8: #{gaan_forward.2} parent=0 // loop_exit
    _

</llo_original>
